<compile_context>
chip_gen: v6e
topology: v6e:2x2x1
jax: 0.10.0
libtpu: 0.0.40
codegen_flags: <defaults>
</compile_context>

<pallas_src>
import functools

import jax
import jax.numpy as jnp
from jax.experimental import pallas as pl
from jax.experimental.pallas import tpu as pltpu

_LANE = 128
_EPS = 1e-5


def _round_up(v, m):
    return (v + m - 1) // m * m


def _pad_to(a, shape):
    widths = [(0, t - s) for s, t in zip(a.shape, shape)]
    if all(w == (0, 0) for w in widths):
        return a
    return jnp.pad(a, widths)


def _act(y, is_leaky, alpha):
    if is_leaky:
        return jnp.where(y > 0.0, y, alpha * y)
    return jnp.maximum(y, 0.0)


# --------------------------------------------------------------------------
# Pass 1: conv1 (1x1) + per-tile partial sums for bn1 batch statistics.
def _conv1_kernel(x_ref, w1_ref, y1_ref, st_ref):
    tn, H, W, Cin = x_ref.shape
    Cmid = w1_ref.shape[1]
    xf = x_ref[...].astype(jnp.float32).reshape(tn * H * W, Cin)
    y = jnp.dot(xf, w1_ref[...], preferred_element_type=jnp.float32)
    y1_ref[...] = y.reshape(tn, H, W, Cmid)
    s = jnp.sum(y, axis=0, keepdims=True)
    ss = jnp.sum(y * y, axis=0, keepdims=True)
    st_ref[...] = jnp.concatenate([s, ss], axis=0)[None]


# Pass 2: bn1 (folded scale/offset) + relu + conv2 (3x3 via one im2col matmul)
#         + per-tile partial sums for bn2.
def _conv2_kernel(y1_ref, sc1_ref, of1_ref, w2_ref, y2_ref, st_ref, pad_ref,
                  *, is_leaky, alpha):
    tn, H, W, Cmid = y1_ref.shape
    a = y1_ref[...].reshape(tn * H * W, Cmid) * sc1_ref[...] + of1_ref[...]
    a = _act(a, is_leaky, alpha)

    # Zero only the 1-pixel halo of the scratch; the interior is fully rewritten.
    zrow = jnp.zeros((tn, 1, W + 2, Cmid), jnp.float32)
    zcol = jnp.zeros((tn, H + 2, 1, Cmid), jnp.float32)
    pad_ref[:, 0:1, :, :] = zrow
    pad_ref[:, H + 1:H + 2, :, :] = zrow
    pad_ref[:, :, 0:1, :] = zcol
    pad_ref[:, :, W + 1:W + 2, :] = zcol
    pad_ref[:, 1:H + 1, 1:W + 1, :] = a.reshape(tn, H, W, Cmid)

    # im2col: 9 shifted views concatenated along the lane-dense channel axis,
    # then a single big-K matmul (K = 9*Cmid) instead of 9 tiny-K matmuls.
    taps = [pad_ref[:, dh:dh + H, dw:dw + W, :].reshape(tn * H * W, Cmid)
            for dh in range(3) for dw in range(3)]
    patches = jnp.concatenate(taps, axis=1)
    y = jnp.dot(patches, w2_ref[...], preferred_element_type=jnp.float32)
    y2_ref[...] = y.reshape(tn, H, W, Cmid)
    s = jnp.sum(y, axis=0, keepdims=True)
    ss = jnp.sum(y * y, axis=0, keepdims=True)
    st_ref[...] = jnp.concatenate([s, ss], axis=0)[None]


# Pass 3: bn2 + relu + conv3 (1x1 expansion) + partial sums for bn3.
def _conv3_kernel(y2_ref, sc2_ref, of2_ref, w3_ref, y3_ref, st_ref,
                  *, is_leaky, alpha):
    tn, H, W, Cmid = y2_ref.shape
    Cout = w3_ref.shape[1]
    a = y2_ref[...].reshape(tn * H * W, Cmid) * sc2_ref[...] + of2_ref[...]
    a = _act(a, is_leaky, alpha)
    y = jnp.dot(a, w3_ref[...], preferred_element_type=jnp.float32)
    y3_ref[...] = y.reshape(tn, H, W, Cout)
    s = jnp.sum(y, axis=0, keepdims=True)
    ss = jnp.sum(y * y, axis=0, keepdims=True)
    st_ref[...] = jnp.concatenate([s, ss], axis=0)[None]


# Pass 4: bn3 + identity residual + final relu.
def _res_kernel(y3_ref, x_ref, sc3_ref, of3_ref, out_ref, *, is_leaky, alpha):
    tn, H, W, C = y3_ref.shape
    y = y3_ref[...].reshape(tn * H * W, C) * sc3_ref[...] + of3_ref[...]
    y = y + x_ref[...].astype(jnp.float32).reshape(tn * H * W, C)
    out_ref[...] = _act(y, is_leaky, alpha).reshape(tn, H, W, C).astype(out_ref.dtype)


# --------------------------------------------------------------------------
def _fold_bn(partials, gamma, beta, count, eps=_EPS):
    """Reduce per-tile (sum, sumsq) partials -> folded per-channel scale/offset."""
    s = jnp.sum(partials[:, 0, :], axis=0)
    ss = jnp.sum(partials[:, 1, :], axis=0)
    mean = s / count
    var = jnp.maximum(ss / count - mean * mean, 0.0)
    scale = gamma * jax.lax.rsqrt(var + eps)
    offset = beta - mean * scale
    return (scale.reshape(1, -1).astype(jnp.float32),
            offset.reshape(1, -1).astype(jnp.float32))


def _pick_tile_n(n, per_image_bytes, budget_bytes=12 << 20):
    tile = 1
    for t in range(1, n + 1):
        if n % t == 0 and t * per_image_bytes <= budget_bytes:
            tile = t
    return tile


def _tpu_params(block_bytes, scratch_bytes=0):
    need = 2 * block_bytes + scratch_bytes + (4 << 20)
    return pltpu.CompilerParams(
        dimension_semantics=("parallel",),
        vmem_limit_bytes=int(min(max(need, 32 << 20), 48 << 20)),
    )


def res_bottleneck(x, params, *, is_leaky=False, alpha=0.1):
    """x: (N, H, W, Cin) NHWC.  Identity residual requires Cin == 4 * out_ch."""
    w1, g1, b1, w2, g2, b2, w3, g3, b3 = params
    N, H, W, Cin = x.shape
    Cmid = w1.shape[1]
    Cout = w3.shape[1]
    assert Cout == Cin, "identity residual needs in_ch == out_ch * 4"
    # TODO(synk): optional `downsample` submodule / stride != 1 path not implemented.

    f32 = jnp.float32
    Cin_p = _round_up(Cin, _LANE)
    Cmid_p = _round_up(Cmid, _LANE)

    # Lane-dense channel padding (zero-padded channels stay exactly zero through
    # BN/relu/conv because their gammas/betas/weights are zero).
    xp = _pad_to(x, (N, H, W, Cin_p))
    w1p = _pad_to(w1.astype(f32), (Cin_p, Cmid_p))
    w2p = _pad_to(w2.astype(f32), (3, 3, Cmid_p, Cmid_p)).reshape(9 * Cmid_p, Cmid_p)
    w3p = _pad_to(w3.astype(f32), (Cmid_p, Cin_p))
    g1p = _pad_to(g1.reshape(-1).astype(f32), (Cmid_p,))
    b1p = _pad_to(b1.reshape(-1).astype(f32), (Cmid_p,))
    g2p = _pad_to(g2.reshape(-1).astype(f32), (Cmid_p,))
    b2p = _pad_to(b2.reshape(-1).astype(f32), (Cmid_p,))
    g3p = _pad_to(g3.reshape(-1).astype(f32), (Cin_p,))
    b3p = _pad_to(b3.reshape(-1).astype(f32), (Cin_p,))

    # Tile over batch only: the 3x3 halo stays inside each image, so the only
    # cross-tile coupling is the BN statistics (handled via partial sums).
    heaviest_per_image = H * W * Cmid_p * 4 * 16     # im2col pass dominates
    tile_n = _pick_tile_n(N, heaviest_per_image)
    ntiles = N // tile_n
    count = float(N * H * W)

    # ---- pass 1: conv1 + bn1 stats --------------------------------------
    y1, st1 = pl.pallas_call(
        _conv1_kernel,
        grid=(ntiles,),
        in_specs=[
            pl.BlockSpec((tile_n, H, W, Cin_p), lambda i: (i, 0, 0, 0)),
            pl.BlockSpec((Cin_p, Cmid_p), lambda i: (0, 0)),
        ],
        out_specs=(
            pl.BlockSpec((tile_n, H, W, Cmid_p), lambda i: (i, 0, 0, 0)),
            pl.BlockSpec((1, 2, Cmid_p), lambda i: (i, 0, 0)),
        ),
        out_shape=(
            jax.ShapeDtypeStruct((N, H, W, Cmid_p), f32),
            jax.ShapeDtypeStruct((ntiles, 2, Cmid_p), f32),
        ),
        compiler_params=_tpu_params(
            4 * (tile_n * H * W * (Cin_p + Cmid_p) + Cin_p * Cmid_p + 2 * Cmid_p)),
        cost_estimate=pl.CostEstimate(
            flops=2 * N * H * W * Cin_p * Cmid_p, transcendentals=0,
            bytes_accessed=4 * (N * H * W * (Cin_p + Cmid_p) + Cin_p * Cmid_p)),
    )(xp, w1p)
    sc1, of1 = _fold_bn(st1, g1p, b1p, count)

    # ---- pass 2: bn1+relu -> conv2 (im2col) + bn2 stats ------------------
    y2, st2 = pl.pallas_call(
        functools.partial(_conv2_kernel, is_leaky=is_leaky, alpha=alpha),
        grid=(ntiles,),
        in_specs=[
            pl.BlockSpec((tile_n, H, W, Cmid_p), lambda i: (i, 0, 0, 0)),
            pl.BlockSpec((1, Cmid_p), lambda i: (0, 0)),
            pl.BlockSpec((1, Cmid_p), lambda i: (0, 0)),
            pl.BlockSpec((9 * Cmid_p, Cmid_p), lambda i: (0, 0)),
        ],
        out_specs=(
            pl.BlockSpec((tile_n, H, W, Cmid_p), lambda i: (i, 0, 0, 0)),
            pl.BlockSpec((1, 2, Cmid_p), lambda i: (i, 0, 0)),
        ),
        out_shape=(
            jax.ShapeDtypeStruct((N, H, W, Cmid_p), f32),
            jax.ShapeDtypeStruct((ntiles, 2, Cmid_p), f32),
        ),
        scratch_shapes=[pltpu.VMEM((tile_n, H + 2, W + 2, Cmid_p), f32)],
        compiler_params=_tpu_params(
            4 * (tile_n * H * W * 11 * Cmid_p + 9 * Cmid_p * Cmid_p),
            scratch_bytes=4 * tile_n * (H + 2) * (W + 2) * Cmid_p),
        cost_estimate=pl.CostEstimate(
            flops=2 * N * H * W * 9 * Cmid_p * Cmid_p, transcendentals=0,
            bytes_accessed=4 * (2 * N * H * W * Cmid_p + 9 * Cmid_p * Cmid_p)),
    )(y1, sc1, of1, w2p)
    sc2, of2 = _fold_bn(st2, g2p, b2p, count)

    # ---- pass 3: bn2+relu -> conv3 + bn3 stats ---------------------------
    y3, st3 = pl.pallas_call(
        functools.partial(_conv3_kernel, is_leaky=is_leaky, alpha=alpha),
        grid=(ntiles,),
        in_specs=[
            pl.BlockSpec((tile_n, H, W, Cmid_p), lambda i: (i, 0, 0, 0)),
            pl.BlockSpec((1, Cmid_p), lambda i: (0, 0)),
            pl.BlockSpec((1, Cmid_p), lambda i: (0, 0)),
            pl.BlockSpec((Cmid_p, Cin_p), lambda i: (0, 0)),
        ],
        out_specs=(
            pl.BlockSpec((tile_n, H, W, Cin_p), lambda i: (i, 0, 0, 0)),
            pl.BlockSpec((1, 2, Cin_p), lambda i: (i, 0, 0)),
        ),
        out_shape=(
            jax.ShapeDtypeStruct((N, H, W, Cin_p), f32),
            jax.ShapeDtypeStruct((ntiles, 2, Cin_p), f32),
        ),
        compiler_params=_tpu_params(
            4 * (tile_n * H * W * (Cmid_p + Cin_p) + Cmid_p * Cin_p)),
        cost_estimate=pl.CostEstimate(
            flops=2 * N * H * W * Cmid_p * Cin_p, transcendentals=0,
            bytes_accessed=4 * (N * H * W * (Cmid_p + Cin_p) + Cmid_p * Cin_p)),
    )(y2, sc2, of2, w3p)
    sc3, of3 = _fold_bn(st3, g3p, b3p, count)

    # ---- pass 4: bn3 + residual + relu -----------------------------------
    outp = pl.pallas_call(
        functools.partial(_res_kernel, is_leaky=is_leaky, alpha=alpha),
        grid=(ntiles,),
        in_specs=[
            pl.BlockSpec((tile_n, H, W, Cin_p), lambda i: (i, 0, 0, 0)),
            pl.BlockSpec((tile_n, H, W, Cin_p), lambda i: (i, 0, 0, 0)),
            pl.BlockSpec((1, Cin_p), lambda i: (0, 0)),
            pl.BlockSpec((1, Cin_p), lambda i: (0, 0)),
        ],
        out_specs=pl.BlockSpec((tile_n, H, W, Cin_p), lambda i: (i, 0, 0, 0)),
        out_shape=jax.ShapeDtypeStruct((N, H, W, Cin_p), x.dtype),
        compiler_params=_tpu_params(4 * tile_n * H * W * 3 * Cin_p),
        cost_estimate=pl.CostEstimate(
            flops=4 * N * H * W * Cin_p, transcendentals=0,
            bytes_accessed=4 * 3 * N * H * W * Cin_p),
    )(y3, xp, sc3, of3)

    return outp[..., :Cout]


# ------------------------------- pure-JAX reference -------------------------------
def _bn_ref(y, g, b, eps=_EPS):
    mean = jnp.mean(y, axis=(0, 1, 2), keepdims=True)
    var = jnp.mean((y - mean) ** 2, axis=(0, 1, 2), keepdims=True)
    return (y - mean) / jnp.sqrt(var + eps) * g.reshape(1, 1, 1, -1) + b.reshape(1, 1, 1, -1)


def res_bottleneck_ref(x, params, *, is_leaky=False, alpha=0.1):
    w1, g1, b1, w2, g2, b2, w3, g3, b3 = params
    act = (lambda y: jnp.where(y > 0, y, alpha * y)) if is_leaky else (
        lambda y: jnp.maximum(y, 0.0))
    dn = ("NHWC", "HWIO", "NHWC")
    Cin, Cmid = w1.shape
    Cout = w3.shape[1]
    y = jax.lax.conv_general_dilated(x, w1.reshape(1, 1, Cin, Cmid),
                                     (1, 1), "VALID", dimension_numbers=dn)
    y = act(_bn_ref(y, g1, b1))
    y = jax.lax.conv_general_dilated(y, w2, (1, 1), ((1, 1), (1, 1)),
                                     dimension_numbers=dn)
    y = act(_bn_ref(y, g2, b2))
    y = jax.lax.conv_general_dilated(y, w3.reshape(1, 1, Cmid, Cout),
                                     (1, 1), "VALID", dimension_numbers=dn)
    y = _bn_ref(y, g3, b3)
    return act(y + x)


if __name__ == "__main__":
    key = jax.random.PRNGKey(0)
    out_ch = 8
    in_ch = out_ch * 4          # identity residual: in_ch == expansion * out_ch
    N, H, W = 2, 8, 8

    ks = jax.random.split(key, 10)
    x = jax.random.normal(ks[0], (N, H, W, in_ch), jnp.float32)
    # conv weights (torch OIHW -> here (Cin,Cout) / HWIO)
    w1 = 0.1 * jax.random.normal(ks[1], (in_ch, out_ch), jnp.float32)
    w2 = 0.1 * jax.random.normal(ks[2], (3, 3, out_ch, out_ch), jnp.float32)
    w3 = 0.1 * jax.random.normal(ks[3], (out_ch, out_ch * 4), jnp.float32)
    # BatchNorm affine params
    g1 = 1.0 + 0.1 * jax.random.normal(ks[4], (1, out_ch), jnp.float32)
    b1 = 0.1 * jax.random.normal(ks[5], (1, out_ch), jnp.float32)
    g2 = 1.0 + 0.1 * jax.random.normal(ks[6], (1, out_ch), jnp.float32)
    b2 = 0.1 * jax.random.normal(ks[7], (1, out_ch), jnp.float32)
    g3 = 1.0 + 0.1 * jax.random.normal(ks[8], (1, out_ch * 4), jnp.float32)
    b3 = 0.1 * jax.random.normal(ks[9], (1, out_ch * 4), jnp.float32)
    params = (w1, g1, b1, w2, g2, b2, w3, g3, b3)

    out = jax.jit(res_bottleneck)(x, params)
    out = jax.block_until_ready(out)

    ref = res_bottleneck_ref(x, params)
    err = float(jnp.max(jnp.abs(out - ref)))
    assert jnp.allclose(out, ref, atol=2e-4, rtol=2e-4), f"max abs err {err}"
    print("KERNEL_OK")
</pallas_src>

<mosaic_0001>
module attributes {stable_mosaic.version = 11 : i64} {
  func.func @_conv1_kernel(%arg0: i32, %arg1: memref<2x8x8x128xf32, #tpu.memory_space<vmem>>, %arg2: memref<128x128xf32, #tpu.memory_space<vmem>>, %arg3: memref<2x8x8x128xf32, #tpu.memory_space<vmem>>, %arg4: memref<1x2x128xf32, #tpu.memory_space<vmem>>) attributes {dimension_semantics = [#tpu.dimension_semantics<parallel>], iteration_bounds = array<i64: 1>, scalar_prefetch = 0 : i64, scratch_operands = 0 : i64, tpu.core_type = #tpu.core_type<tc>, window_params = [{transform_indices = @transform_0, window_bounds = array<i64: 2, 8, 8, 128>}, {pipeline_mode = #tpu.pipeline_mode<synchronous>, transform_indices = @transform_1, window_bounds = array<i64: 128, 128>}, {transform_indices = @transform_2, window_bounds = array<i64: 2, 8, 8, 128>}, {transform_indices = @transform_3, window_bounds = array<i64: 1, 2, 128>}]} {
    %c0 = arith.constant 0 : index
    %c0_0 = arith.constant 0 : index
    %c0_1 = arith.constant 0 : index
    %c0_2 = arith.constant 0 : index
    %0 = vector.load %arg1[%c0, %c0_0, %c0_1, %c0_2] : memref<2x8x8x128xf32, #tpu.memory_space<vmem>>, vector<2x8x8x128xf32>
    %1 = vector.shape_cast %0 : vector<2x8x8x128xf32> to vector<128x128xf32>
    %c0_3 = arith.constant 0 : index
    %c0_4 = arith.constant 0 : index
    %2 = vector.load %arg2[%c0_3, %c0_4] : memref<128x128xf32, #tpu.memory_space<vmem>>, vector<128x128xf32>
    %cst = arith.constant dense<0.000000e+00> : vector<128x128xf32>
    %3 = tpu.matmul %1, %2, %cst {dimension_numbers = #tpu.dot_dimension_numbers<[1], [0], [0], [1], [0, 0, 1, 1], [], []>} : vector<128x128xf32>, vector<128x128xf32>, vector<128x128xf32> -> vector<128x128xf32>
    %4 = vector.shape_cast %3 : vector<128x128xf32> to vector<2x8x8x128xf32>
    %c0_5 = arith.constant 0 : index
    %c0_6 = arith.constant 0 : index
    %c0_7 = arith.constant 0 : index
    %c0_8 = arith.constant 0 : index
    %5 = vector.load %arg3[%c0_5, %c0_6, %c0_7, %c0_8] : memref<2x8x8x128xf32, #tpu.memory_space<vmem>>, vector<2x8x8x128xf32>
    tpu.vector_store %arg3[%c0_5, %c0_6, %c0_7, %c0_8], %4 {strides = array<i32>} : memref<2x8x8x128xf32, #tpu.memory_space<vmem>>, vector<2x8x8x128xf32>,
    %cst_9 = arith.constant dense<0.000000e+00> : vector<128xf32>
    %6 = vector.multi_reduction <add>, %3, %cst_9 [0] : vector<128x128xf32> to vector<128xf32>
    %7 = vector.shape_cast %6 : vector<128xf32> to vector<1x128xf32>
    %8 = arith.mulf %3, %3 : vector<128x128xf32>
    %cst_10 = arith.constant dense<0.000000e+00> : vector<128xf32>
    %9 = vector.multi_reduction <add>, %8, %cst_10 [0] : vector<128x128xf32> to vector<128xf32>
    %10 = vector.shape_cast %9 : vector<128xf32> to vector<1x128xf32>
    %11 = tpu.concatenate %7, %10 in 0 : vector<1x128xf32>, vector<1x128xf32> -> vector<2x128xf32>
    %12 = vector.shape_cast %11 : vector<2x128xf32> to vector<1x2x128xf32>
    %c0_11 = arith.constant 0 : index
    %c0_12 = arith.constant 0 : index
    %c0_13 = arith.constant 0 : index
    %13 = vector.load %arg4[%c0_11, %c0_12, %c0_13] : memref<1x2x128xf32, #tpu.memory_space<vmem>>, vector<1x2x128xf32>
    tpu.vector_store %arg4[%c0_11, %c0_12, %c0_13], %12 {strides = array<i32>} : memref<1x2x128xf32, #tpu.memory_space<vmem>>, vector<1x2x128xf32>,
    return
  }
  func.func @transform_0(%arg0: i32) -> (i32, i32, i32, i32) {
    %c0_i32 = arith.constant 0 : i32
    %c0_i32_0 = arith.constant 0 : i32
    %c0_i32_1 = arith.constant 0 : i32
    %c0_i32_2 = arith.constant 0 : i32
    return %arg0, %c0_i32, %c0_i32_0, %c0_i32_1 : i32, i32, i32, i32
  }
  func.func @transform_1(%arg0: i32) -> (i32, i32) {
    %c0_i32 = arith.constant 0 : i32
    %c0_i32_0 = arith.constant 0 : i32
    %c0_i32_1 = arith.constant 0 : i32
    return %c0_i32, %c0_i32_0 : i32, i32
  }
  func.func @transform_2(%arg0: i32) -> (i32, i32, i32, i32) {
    %c0_i32 = arith.constant 0 : i32
    %c0_i32_0 = arith.constant 0 : i32
    %c0_i32_1 = arith.constant 0 : i32
    %c0_i32_2 = arith.constant 0 : i32
    return %arg0, %c0_i32, %c0_i32_0, %c0_i32_1 : i32, i32, i32, i32
  }
  func.func @transform_3(%arg0: i32) -> (i32, i32, i32) {
    %c0_i32 = arith.constant 0 : i32
    %c0_i32_0 = arith.constant 0 : i32
    %c0_i32_1 = arith.constant 0 : i32
    return %arg0, %c0_i32, %c0_i32_0 : i32, i32, i32
  }
}

module attributes {stable_mosaic.version = 11 : i64} {
  func.func @_conv2_kernel(%arg0: i32, %arg1: memref<2x8x8x128xf32, #tpu.memory_space<vmem>>, %arg2: memref<1x128xf32, #tpu.memory_space<vmem>>, %arg3: memref<1x128xf32, #tpu.memory_space<vmem>>, %arg4: memref<1152x128xf32, #tpu.memory_space<vmem>>, %arg5: memref<2x8x8x128xf32, #tpu.memory_space<vmem>>, %arg6: memref<1x2x128xf32, #tpu.memory_space<vmem>>, %arg7: memref<2x10x10x128xf32, #tpu.memory_space<vmem>>) attributes {dimension_semantics = [#tpu.dimension_semantics<parallel>], iteration_bounds = array<i64: 1>, scalar_prefetch = 0 : i64, scratch_operands = 1 : i64, tpu.core_type = #tpu.core_type<tc>, window_params = [{transform_indices = @transform_0, window_bounds = array<i64: 2, 8, 8, 128>}, {pipeline_mode = #tpu.pipeline_mode<synchronous>, transform_indices = @transform_1, window_bounds = array<i64: 1, 128>}, {pipeline_mode = #tpu.pipeline_mode<synchronous>, transform_indices = @transform_2, window_bounds = array<i64: 1, 128>}, {pipeline_mode = #tpu.pipeline_mode<synchronous>, transform_indices = @transform_3, window_bounds = array<i64: 1152, 128>}, {transform_indices = @transform_4, window_bounds = array<i64: 2, 8, 8, 128>}, {transform_indices = @transform_5, window_bounds = array<i64: 1, 2, 128>}]} {
    %c0 = arith.constant 0 : index
    %c0_0 = arith.constant 0 : index
    %c0_1 = arith.constant 0 : index
    %c0_2 = arith.constant 0 : index
    %0 = vector.load %arg1[%c0, %c0_0, %c0_1, %c0_2] : memref<2x8x8x128xf32, #tpu.memory_space<vmem>>, vector<2x8x8x128xf32>
    %1 = vector.shape_cast %0 : vector<2x8x8x128xf32> to vector<128x128xf32>
    %c0_3 = arith.constant 0 : index
    %c0_4 = arith.constant 0 : index
    %2 = vector.load %arg2[%c0_3, %c0_4] : memref<1x128xf32, #tpu.memory_space<vmem>>, vector<1x128xf32>
    %3 = vector.broadcast %2 : vector<1x128xf32> to vector<128x128xf32>
    %4 = arith.mulf %1, %3 : vector<128x128xf32>
    %c0_5 = arith.constant 0 : index
    %c0_6 = arith.constant 0 : index
    %5 = vector.load %arg3[%c0_5, %c0_6] : memref<1x128xf32, #tpu.memory_space<vmem>>, vector<1x128xf32>
    %6 = vector.broadcast %5 : vector<1x128xf32> to vector<128x128xf32>
    %7 = arith.addf %4, %6 : vector<128x128xf32>
    %cst = arith.constant 0.000000e+00 : f32
    %8 = vector.broadcast %cst : f32 to vector<128x128xf32>
    %9 = arith.maximumf %7, %8 : vector<128x128xf32>
    %cst_7 = arith.constant 0.000000e+00 : f32
    %10 = vector.broadcast %cst_7 : f32 to vector<2x1x10x128xf32>
    %cst_8 = arith.constant 0.000000e+00 : f32
    %11 = vector.broadcast %cst_8 : f32 to vector<2x10x1x128xf32>
    %c0_9 = arith.constant 0 : index
    %c0_10 = arith.constant 0 : index
    %c0_11 = arith.constant 0 : index
    %c0_12 = arith.constant 0 : index
    %12 = vector.load %arg7[%c0_9, %c0_10, %c0_11, %c0_12] : memref<2x10x10x128xf32, #tpu.memory_space<vmem>>, vector<2x1x10x128xf32>
    tpu.vector_store %arg7[%c0_9, %c0_10, %c0_11, %c0_12], %10 {strides = array<i32>} : memref<2x10x10x128xf32, #tpu.memory_space<vmem>>, vector<2x1x10x128xf32>,
    %c0_13 = arith.constant 0 : index
    %c9 = arith.constant 9 : index
    %c0_14 = arith.constant 0 : index
    %c0_15 = arith.constant 0 : index
    %13 = vector.load %arg7[%c0_13, %c9, %c0_14, %c0_15] : memref<2x10x10x128xf32, #tpu.memory_space<vmem>>, vector<2x1x10x128xf32>
    tpu.vector_store %arg7[%c0_13, %c9, %c0_14, %c0_15], %10 {strides = array<i32>} : memref<2x10x10x128xf32, #tpu.memory_space<vmem>>, vector<2x1x10x128xf32>,
    %c0_16 = arith.constant 0 : index
    %c0_17 = arith.constant 0 : index
    %c0_18 = arith.constant 0 : index
    %c0_19 = arith.constant 0 : index
    %14 = vector.load %arg7[%c0_16, %c0_17, %c0_18, %c0_19] : memref<2x10x10x128xf32, #tpu.memory_space<vmem>>, vector<2x10x1x128xf32>
    tpu.vector_store %arg7[%c0_16, %c0_17, %c0_18, %c0_19], %11 {strides = array<i32>} : memref<2x10x10x128xf32, #tpu.memory_space<vmem>>, vector<2x10x1x128xf32>,
    %c0_20 = arith.constant 0 : index
    %c0_21 = arith.constant 0 : index
    %c9_22 = arith.constant 9 : index
    %c0_23 = arith.constant 0 : index
    %15 = vector.load %arg7[%c0_20, %c0_21, %c9_22, %c0_23] : memref<2x10x10x128xf32, #tpu.memory_space<vmem>>, vector<2x10x1x128xf32>
    tpu.vector_store %arg7[%c0_20, %c0_21, %c9_22, %c0_23], %11 {strides = array<i32>} : memref<2x10x10x128xf32, #tpu.memory_space<vmem>>, vector<2x10x1x128xf32>,
    %16 = vector.shape_cast %9 : vector<128x128xf32> to vector<2x8x8x128xf32>
    %c0_24 = arith.constant 0 : index
    %c1 = arith.constant 1 : index
    %c1_25 = arith.constant 1 : index
    %c0_26 = arith.constant 0 : index
    %17 = vector.load %arg7[%c0_24, %c1, %c1_25, %c0_26] : memref<2x10x10x128xf32, #tpu.memory_space<vmem>>, vector<2x8x8x128xf32>
    tpu.vector_store %arg7[%c0_24, %c1, %c1_25, %c0_26], %16 {strides = array<i32>} : memref<2x10x10x128xf32, #tpu.memory_space<vmem>>, vector<2x8x8x128xf32>,
    %c0_27 = arith.constant 0 : index
    %c0_28 = arith.constant 0 : index
    %c0_29 = arith.constant 0 : index
    %c0_30 = arith.constant 0 : index
    %18 = vector.load %arg7[%c0_27, %c0_28, %c0_29, %c0_30] : memref<2x10x10x128xf32, #tpu.memory_space<vmem>>, vector<2x8x8x128xf32>
    %19 = vector.shape_cast %18 : vector<2x8x8x128xf32> to vector<128x128xf32>
    %c0_31 = arith.constant 0 : index
    %c0_32 = arith.constant 0 : index
    %c1_33 = arith.constant 1 : index
    %c0_34 = arith.constant 0 : index
    %20 = vector.load %arg7[%c0_31, %c0_32, %c1_33, %c0_34] : memref<2x10x10x128xf32, #tpu.memory_space<vmem>>, vector<2x8x8x128xf32>
    %21 = vector.shape_cast %20 : vector<2x8x8x128xf32> to vector<128x128xf32>
    %c0_35 = arith.constant 0 : index
    %c0_36 = arith.constant 0 : index
    %c2 = arith.constant 2 : index
    %c0_37 = arith.constant 0 : index
    %22 = vector.load %arg7[%c0_35, %c0_36, %c2, %c0_37] : memref<2x10x10x128xf32, #tpu.memory_space<vmem>>, vector<2x8x8x128xf32>
    %23 = vector.shape_cast %22 : vector<2x8x8x128xf32> to vector<128x128xf32>
    %c0_38 = arith.constant 0 : index
    %c1_39 = arith.constant 1 : index
    %c0_40 = arith.constant 0 : index
    %c0_41 = arith.constant 0 : index
    %24 = vector.load %arg7[%c0_38, %c1_39, %c0_40, %c0_41] : memref<2x10x10x128xf32, #tpu.memory_space<vmem>>, vector<2x8x8x128xf32>
    %25 = vector.shape_cast %24 : vector<2x8x8x128xf32> to vector<128x128xf32>
    %c0_42 = arith.constant 0 : index
    %c1_43 = arith.constant 1 : index
    %c1_44 = arith.constant 1 : index
    %c0_45 = arith.constant 0 : index
    %26 = vector.load %arg7[%c0_42, %c1_43, %c1_44, %c0_45] : memref<2x10x10x128xf32, #tpu.memory_space<vmem>>, vector<2x8x8x128xf32>
    %27 = vector.shape_cast %26 : vector<2x8x8x128xf32> to vector<128x128xf32>
    %c0_46 = arith.constant 0 : index
    %c1_47 = arith.constant 1 : index
    %c2_48 = arith.constant 2 : index
    %c0_49 = arith.constant 0 : index
    %28 = vector.load %arg7[%c0_46, %c1_47, %c2_48, %c0_49] : memref<2x10x10x128xf32, #tpu.memory_space<vmem>>, vector<2x8x8x128xf32>
    %29 = vector.shape_cast %28 : vector<2x8x8x128xf32> to vector<128x128xf32>
    %c0_50 = arith.constant 0 : index
    %c2_51 = arith.constant 2 : index
    %c0_52 = arith.constant 0 : index
    %c0_53 = arith.constant 0 : index
    %30 = vector.load %arg7[%c0_50, %c2_51, %c0_52, %c0_53] : memref<2x10x10x128xf32, #tpu.memory_space<vmem>>, vector<2x8x8x128xf32>
    %31 = vector.shape_cast %30 : vector<2x8x8x128xf32> to vector<128x128xf32>
    %c0_54 = arith.constant 0 : index
    %c2_55 = arith.constant 2 : index
    %c1_56 = arith.constant 1 : index
    %c0_57 = arith.constant 0 : index
    %32 = vector.load %arg7[%c0_54, %c2_55, %c1_56, %c0_57] : memref<2x10x10x128xf32, #tpu.memory_space<vmem>>, vector<2x8x8x128xf32>
    %33 = vector.shape_cast %32 : vector<2x8x8x128xf32> to vector<128x128xf32>
    %c0_58 = arith.constant 0 : index
    %c2_59 = arith.constant 2 : index
    %c2_60 = arith.constant 2 : index
    %c0_61 = arith.constant 0 : index
    %34 = vector.load %arg7[%c0_58, %c2_59, %c2_60, %c0_61] : memref<2x10x10x128xf32, #tpu.memory_space<vmem>>, vector<2x8x8x128xf32>
    %35 = vector.shape_cast %34 : vector<2x8x8x128xf32> to vector<128x128xf32>
    %36 = tpu.concatenate %19, %21, %23, %25, %27, %29, %31, %33, %35 in 1 : vector<128x128xf32>, vector<128x128xf32>, vector<128x128xf32>, vector<128x128xf32>, vector<128x128xf32>, vector<128x128xf32>, vector<128x128xf32>, vector<128x128xf32>, vector<128x128xf32> -> vector<128x1152xf32>
    %c0_62 = arith.constant 0 : index
    %c0_63 = arith.constant 0 : index
    %37 = vector.load %arg4[%c0_62, %c0_63] : memref<1152x128xf32, #tpu.memory_space<vmem>>, vector<1152x128xf32>
    %cst_64 = arith.constant dense<0.000000e+00> : vector<128x128xf32>
    %38 = tpu.matmul %36, %37, %cst_64 {dimension_numbers = #tpu.dot_dimension_numbers<[1], [0], [0], [1], [0, 0, 1, 1], [], []>} : vector<128x1152xf32>, vector<1152x128xf32>, vector<128x128xf32> -> vector<128x128xf32>
    %39 = vector.shape_cast %38 : vector<128x128xf32> to vector<2x8x8x128xf32>
    %c0_65 = arith.constant 0 : index
    %c0_66 = arith.constant 0 : index
    %c0_67 = arith.constant 0 : index
    %c0_68 = arith.constant 0 : index
    %40 = vector.load %arg5[%c0_65, %c0_66, %c0_67, %c0_68] : memref<2x8x8x128xf32, #tpu.memory_space<vmem>>, vector<2x8x8x128xf32>
    tpu.vector_store %arg5[%c0_65, %c0_66, %c0_67, %c0_68], %39 {strides = array<i32>} : memref<2x8x8x128xf32, #tpu.memory_space<vmem>>, vector<2x8x8x128xf32>,
    %cst_69 = arith.constant dense<0.000000e+00> : vector<128xf32>
    %41 = vector.multi_reduction <add>, %38, %cst_69 [0] : vector<128x128xf32> to vector<128xf32>
    %42 = vector.shape_cast %41 : vector<128xf32> to vector<1x128xf32>
    %43 = arith.mulf %38, %38 : vector<128x128xf32>
    %cst_70 = arith.constant dense<0.000000e+00> : vector<128xf32>
    %44 = vector.multi_reduction <add>, %43, %cst_70 [0] : vector<128x128xf32> to vector<128xf32>
    %45 = vector.shape_cast %44 : vector<128xf32> to vector<1x128xf32>
    %46 = tpu.concatenate %42, %45 in 0 : vector<1x128xf32>, vector<1x128xf32> -> vector<2x128xf32>
    %47 = vector.shape_cast %46 : vector<2x128xf32> to vector<1x2x128xf32>
    %c0_71 = arith.constant 0 : index
    %c0_72 = arith.constant 0 : index
    %c0_73 = arith.constant 0 : index
    %48 = vector.load %arg6[%c0_71, %c0_72, %c0_73] : memref<1x2x128xf32, #tpu.memory_space<vmem>>, vector<1x2x128xf32>
    tpu.vector_store %arg6[%c0_71, %c0_72, %c0_73], %47 {strides = array<i32>} : memref<1x2x128xf32, #tpu.memory_space<vmem>>, vector<1x2x128xf32>,
    return
  }
  func.func @transform_0(%arg0: i32) -> (i32, i32, i32, i32) {
    %c0_i32 = arith.constant 0 : i32
    %c0_i32_0 = arith.constant 0 : i32
    %c0_i32_1 = arith.constant 0 : i32
    %c0_i32_2 = arith.constant 0 : i32
    return %arg0, %c0_i32, %c0_i32_0, %c0_i32_1 : i32, i32, i32, i32
  }
  func.func @transform_1(%arg0: i32) -> (i32, i32) {
    %c0_i32 = arith.constant 0 : i32
    %c0_i32_0 = arith.constant 0 : i32
    %c0_i32_1 = arith.constant 0 : i32
    return %c0_i32, %c0_i32_0 : i32, i32
  }
  func.func @transform_2(%arg0: i32) -> (i32, i32) {
    %c0_i32 = arith.constant 0 : i32
    %c0_i32_0 = arith.constant 0 : i32
    %c0_i32_1 = arith.constant 0 : i32
    return %c0_i32, %c0_i32_0 : i32, i32
  }
  func.func @transform_3(%arg0: i32) -> (i32, i32) {
    %c0_i32 = arith.constant 0 : i32
    %c0_i32_0 = arith.constant 0 : i32
    %c0_i32_1 = arith.constant 0 : i32
    return %c0_i32, %c0_i32_0 : i32, i32
  }
  func.func @transform_4(%arg0: i32) -> (i32, i32, i32, i32) {
    %c0_i32 = arith.constant 0 : i32
    %c0_i32_0 = arith.constant 0 : i32
    %c0_i32_1 = arith.constant 0 : i32
    %c0_i32_2 = arith.constant 0 : i32
    return %arg0, %c0_i32, %c0_i32_0, %c0_i32_1 : i32, i32, i32, i32
  }
  func.func @transform_5(%arg0: i32) -> (i32, i32, i32) {
    %c0_i32 = arith.constant 0 : i32
    %c0_i32_0 = arith.constant 0 : i32
    %c0_i32_1 = arith.constant 0 : i32
    return %arg0, %c0_i32, %c0_i32_0 : i32, i32, i32
  }
}

module attributes {stable_mosaic.version = 11 : i64} {
  func.func @_conv3_kernel(%arg0: i32, %arg1: memref<2x8x8x128xf32, #tpu.memory_space<vmem>>, %arg2: memref<1x128xf32, #tpu.memory_space<vmem>>, %arg3: memref<1x128xf32, #tpu.memory_space<vmem>>, %arg4: memref<128x128xf32, #tpu.memory_space<vmem>>, %arg5: memref<2x8x8x128xf32, #tpu.memory_space<vmem>>, %arg6: memref<1x2x128xf32, #tpu.memory_space<vmem>>) attributes {dimension_semantics = [#tpu.dimension_semantics<parallel>], iteration_bounds = array<i64: 1>, scalar_prefetch = 0 : i64, scratch_operands = 0 : i64, tpu.core_type = #tpu.core_type<tc>, window_params = [{transform_indices = @transform_0, window_bounds = array<i64: 2, 8, 8, 128>}, {pipeline_mode = #tpu.pipeline_mode<synchronous>, transform_indices = @transform_1, window_bounds = array<i64: 1, 128>}, {pipeline_mode = #tpu.pipeline_mode<synchronous>, transform_indices = @transform_2, window_bounds = array<i64: 1, 128>}, {pipeline_mode = #tpu.pipeline_mode<synchronous>, transform_indices = @transform_3, window_bounds = array<i64: 128, 128>}, {transform_indices = @transform_4, window_bounds = array<i64: 2, 8, 8, 128>}, {transform_indices = @transform_5, window_bounds = array<i64: 1, 2, 128>}]} {
    %c0 = arith.constant 0 : index
    %c0_0 = arith.constant 0 : index
    %c0_1 = arith.constant 0 : index
    %c0_2 = arith.constant 0 : index
    %0 = vector.load %arg1[%c0, %c0_0, %c0_1, %c0_2] : memref<2x8x8x128xf32, #tpu.memory_space<vmem>>, vector<2x8x8x128xf32>
    %1 = vector.shape_cast %0 : vector<2x8x8x128xf32> to vector<128x128xf32>
    %c0_3 = arith.constant 0 : index
    %c0_4 = arith.constant 0 : index
    %2 = vector.load %arg2[%c0_3, %c0_4] : memref<1x128xf32, #tpu.memory_space<vmem>>, vector<1x128xf32>
    %3 = vector.broadcast %2 : vector<1x128xf32> to vector<128x128xf32>
    %4 = arith.mulf %1, %3 : vector<128x128xf32>
    %c0_5 = arith.constant 0 : index
    %c0_6 = arith.constant 0 : index
    %5 = vector.load %arg3[%c0_5, %c0_6] : memref<1x128xf32, #tpu.memory_space<vmem>>, vector<1x128xf32>
    %6 = vector.broadcast %5 : vector<1x128xf32> to vector<128x128xf32>
    %7 = arith.addf %4, %6 : vector<128x128xf32>
    %cst = arith.constant 0.000000e+00 : f32
    %8 = vector.broadcast %cst : f32 to vector<128x128xf32>
    %9 = arith.maximumf %7, %8 : vector<128x128xf32>
    %c0_7 = arith.constant 0 : index
    %c0_8 = arith.constant 0 : index
    %10 = vector.load %arg4[%c0_7, %c0_8] : memref<128x128xf32, #tpu.memory_space<vmem>>, vector<128x128xf32>
    %cst_9 = arith.constant dense<0.000000e+00> : vector<128x128xf32>
    %11 = tpu.matmul %9, %10, %cst_9 {dimension_numbers = #tpu.dot_dimension_numbers<[1], [0], [0], [1], [0, 0, 1, 1], [], []>} : vector<128x128xf32>, vector<128x128xf32>, vector<128x128xf32> -> vector<128x128xf32>
    %12 = vector.shape_cast %11 : vector<128x128xf32> to vector<2x8x8x128xf32>
    %c0_10 = arith.constant 0 : index
    %c0_11 = arith.constant 0 : index
    %c0_12 = arith.constant 0 : index
    %c0_13 = arith.constant 0 : index
    %13 = vector.load %arg5[%c0_10, %c0_11, %c0_12, %c0_13] : memref<2x8x8x128xf32, #tpu.memory_space<vmem>>, vector<2x8x8x128xf32>
    tpu.vector_store %arg5[%c0_10, %c0_11, %c0_12, %c0_13], %12 {strides = array<i32>} : memref<2x8x8x128xf32, #tpu.memory_space<vmem>>, vector<2x8x8x128xf32>,
    %cst_14 = arith.constant dense<0.000000e+00> : vector<128xf32>
    %14 = vector.multi_reduction <add>, %11, %cst_14 [0] : vector<128x128xf32> to vector<128xf32>
    %15 = vector.shape_cast %14 : vector<128xf32> to vector<1x128xf32>
    %16 = arith.mulf %11, %11 : vector<128x128xf32>
    %cst_15 = arith.constant dense<0.000000e+00> : vector<128xf32>
    %17 = vector.multi_reduction <add>, %16, %cst_15 [0] : vector<128x128xf32> to vector<128xf32>
    %18 = vector.shape_cast %17 : vector<128xf32> to vector<1x128xf32>
    %19 = tpu.concatenate %15, %18 in 0 : vector<1x128xf32>, vector<1x128xf32> -> vector<2x128xf32>
    %20 = vector.shape_cast %19 : vector<2x128xf32> to vector<1x2x128xf32>
    %c0_16 = arith.constant 0 : index
    %c0_17 = arith.constant 0 : index
    %c0_18 = arith.constant 0 : index
    %21 = vector.load %arg6[%c0_16, %c0_17, %c0_18] : memref<1x2x128xf32, #tpu.memory_space<vmem>>, vector<1x2x128xf32>
    tpu.vector_store %arg6[%c0_16, %c0_17, %c0_18], %20 {strides = array<i32>} : memref<1x2x128xf32, #tpu.memory_space<vmem>>, vector<1x2x128xf32>,
    return
  }
  func.func @transform_0(%arg0: i32) -> (i32, i32, i32, i32) {
    %c0_i32 = arith.constant 0 : i32
    %c0_i32_0 = arith.constant 0 : i32
    %c0_i32_1 = arith.constant 0 : i32
    %c0_i32_2 = arith.constant 0 : i32
    return %arg0, %c0_i32, %c0_i32_0, %c0_i32_1 : i32, i32, i32, i32
  }
  func.func @transform_1(%arg0: i32) -> (i32, i32) {
    %c0_i32 = arith.constant 0 : i32
    %c0_i32_0 = arith.constant 0 : i32
    %c0_i32_1 = arith.constant 0 : i32
    return %c0_i32, %c0_i32_0 : i32, i32
  }
  func.func @transform_2(%arg0: i32) -> (i32, i32) {
    %c0_i32 = arith.constant 0 : i32
    %c0_i32_0 = arith.constant 0 : i32
    %c0_i32_1 = arith.constant 0 : i32
    return %c0_i32, %c0_i32_0 : i32, i32
  }
  func.func @transform_3(%arg0: i32) -> (i32, i32) {
    %c0_i32 = arith.constant 0 : i32
    %c0_i32_0 = arith.constant 0 : i32
    %c0_i32_1 = arith.constant 0 : i32
    return %c0_i32, %c0_i32_0 : i32, i32
  }
  func.func @transform_4(%arg0: i32) -> (i32, i32, i32, i32) {
    %c0_i32 = arith.constant 0 : i32
    %c0_i32_0 = arith.constant 0 : i32
    %c0_i32_1 = arith.constant 0 : i32
    %c0_i32_2 = arith.constant 0 : i32
    return %arg0, %c0_i32, %c0_i32_0, %c0_i32_1 : i32, i32, i32, i32
  }
  func.func @transform_5(%arg0: i32) -> (i32, i32, i32) {
    %c0_i32 = arith.constant 0 : i32
    %c0_i32_0 = arith.constant 0 : i32
    %c0_i32_1 = arith.constant 0 : i32
    return %arg0, %c0_i32, %c0_i32_0 : i32, i32, i32
  }
}

module attributes {stable_mosaic.version = 11 : i64} {
  func.func @_res_kernel(%arg0: i32, %arg1: memref<2x8x8x128xf32, #tpu.memory_space<vmem>>, %arg2: memref<2x8x8x128xf32, #tpu.memory_space<vmem>>, %arg3: memref<1x128xf32, #tpu.memory_space<vmem>>, %arg4: memref<1x128xf32, #tpu.memory_space<vmem>>, %arg5: memref<2x8x8x128xf32, #tpu.memory_space<vmem>>) attributes {dimension_semantics = [#tpu.dimension_semantics<parallel>], iteration_bounds = array<i64: 1>, scalar_prefetch = 0 : i64, scratch_operands = 0 : i64, tpu.core_type = #tpu.core_type<tc>, window_params = [{transform_indices = @transform_0, window_bounds = array<i64: 2, 8, 8, 128>}, {transform_indices = @transform_1, window_bounds = array<i64: 2, 8, 8, 128>}, {pipeline_mode = #tpu.pipeline_mode<synchronous>, transform_indices = @transform_2, window_bounds = array<i64: 1, 128>}, {pipeline_mode = #tpu.pipeline_mode<synchronous>, transform_indices = @transform_3, window_bounds = array<i64: 1, 128>}, {transform_indices = @transform_4, window_bounds = array<i64: 2, 8, 8, 128>}]} {
    %c0 = arith.constant 0 : index
    %c0_0 = arith.constant 0 : index
    %c0_1 = arith.constant 0 : index
    %c0_2 = arith.constant 0 : index
    %0 = vector.load %arg1[%c0, %c0_0, %c0_1, %c0_2] : memref<2x8x8x128xf32, #tpu.memory_space<vmem>>, vector<2x8x8x128xf32>
    %1 = vector.shape_cast %0 : vector<2x8x8x128xf32> to vector<128x128xf32>
    %c0_3 = arith.constant 0 : index
    %c0_4 = arith.constant 0 : index
    %2 = vector.load %arg3[%c0_3, %c0_4] : memref<1x128xf32, #tpu.memory_space<vmem>>, vector<1x128xf32>
    %3 = vector.broadcast %2 : vector<1x128xf32> to vector<128x128xf32>
    %4 = arith.mulf %1, %3 : vector<128x128xf32>
    %c0_5 = arith.constant 0 : index
    %c0_6 = arith.constant 0 : index
    %5 = vector.load %arg4[%c0_5, %c0_6] : memref<1x128xf32, #tpu.memory_space<vmem>>, vector<1x128xf32>
    %6 = vector.broadcast %5 : vector<1x128xf32> to vector<128x128xf32>
    %7 = arith.addf %4, %6 : vector<128x128xf32>
    %c0_7 = arith.constant 0 : index
    %c0_8 = arith.constant 0 : index
    %c0_9 = arith.constant 0 : index
    %c0_10 = arith.constant 0 : index
    %8 = vector.load %arg2[%c0_7, %c0_8, %c0_9, %c0_10] : memref<2x8x8x128xf32, #tpu.memory_space<vmem>>, vector<2x8x8x128xf32>
    %9 = vector.shape_cast %8 : vector<2x8x8x128xf32> to vector<128x128xf32>
    %10 = arith.addf %7, %9 : vector<128x128xf32>
    %cst = arith.constant 0.000000e+00 : f32
    %11 = vector.broadcast %cst : f32 to vector<128x128xf32>
    %12 = arith.maximumf %10, %11 : vector<128x128xf32>
    %13 = vector.shape_cast %12 : vector<128x128xf32> to vector<2x8x8x128xf32>
    %c0_11 = arith.constant 0 : index
    %c0_12 = arith.constant 0 : index
    %c0_13 = arith.constant 0 : index
    %c0_14 = arith.constant 0 : index
    %14 = vector.load %arg5[%c0_11, %c0_12, %c0_13, %c0_14] : memref<2x8x8x128xf32, #tpu.memory_space<vmem>>, vector<2x8x8x128xf32>
    tpu.vector_store %arg5[%c0_11, %c0_12, %c0_13, %c0_14], %13 {strides = array<i32>} : memref<2x8x8x128xf32, #tpu.memory_space<vmem>>, vector<2x8x8x128xf32>,
    return
  }
  func.func @transform_0(%arg0: i32) -> (i32, i32, i32, i32) {
    %c0_i32 = arith.constant 0 : i32
    %c0_i32_0 = arith.constant 0 : i32
    %c0_i32_1 = arith.constant 0 : i32
    %c0_i32_2 = arith.constant 0 : i32
    return %arg0, %c0_i32, %c0_i32_0, %c0_i32_1 : i32, i32, i32, i32
  }
  func.func @transform_1(%arg0: i32) -> (i32, i32, i32, i32) {
    %c0_i32 = arith.constant 0 : i32
    %c0_i32_0 = arith.constant 0 : i32
    %c0_i32_1 = arith.constant 0 : i32
    %c0_i32_2 = arith.constant 0 : i32
    return %arg0, %c0_i32, %c0_i32_0, %c0_i32_1 : i32, i32, i32, i32
  }
  func.func @transform_2(%arg0: i32) -> (i32, i32) {
    %c0_i32 = arith.constant 0 : i32
    %c0_i32_0 = arith.constant 0 : i32
    %c0_i32_1 = arith.constant 0 : i32
    return %c0_i32, %c0_i32_0 : i32, i32
  }
  func.func @transform_3(%arg0: i32) -> (i32, i32) {
    %c0_i32 = arith.constant 0 : i32
    %c0_i32_0 = arith.constant 0 : i32
    %c0_i32_1 = arith.constant 0 : i32
    return %c0_i32, %c0_i32_0 : i32, i32
  }
  func.func @transform_4(%arg0: i32) -> (i32, i32, i32, i32) {
    %c0_i32 = arith.constant 0 : i32
    %c0_i32_0 = arith.constant 0 : i32
    %c0_i32_1 = arith.constant 0 : i32
    %c0_i32_2 = arith.constant 0 : i32
    return %arg0, %c0_i32, %c0_i32_0, %c0_i32_1 : i32, i32, i32, i32
  }
}

</mosaic_0001>

<llo_original>
// kernel: res_bottleneck.4
$region0: #{res_bottleneck.4}
  #allocation0 [shape = 'u32[]', space=smem, size = 0x4, offset = 0x4, fixed_abs, tag = 'smem constant byte address 0x4 - core index']
  #allocation1 [shape = 'u32[144,128]{1,0:T(1,128)}', space=vmem, size = 0x12000, scoped, tag = 'internal scratch']
  %s0 = inlined_call_operand.vmem [shape: f32[2,8,8,128], index: 0, kind: input, shape index: {}]
  %s1 = inlined_call_operand.vmem [shape: f32[128,128], index: 1, kind: input, shape index: {}]
  %s2 = inlined_call_operand.vmem [shape: f32[2,8,8,128], index: 2, kind: output, shape index: {0}]
  %s3 = inlined_call_operand.vmem [shape: f32[1,2,128], index: 3, kind: output, shape index: {1}]
  %4 = xla_tuple %s2, %s3
  %s5 = sld [smem:[#allocation0]]
  $region26: #{res_bottleneck.4} parent=0
    _
  %s7 = ssub.s32 1, %s5
  %s8 = scalar_select 0, %s7, %s5
  // Predicated region
  $region2: #{res_bottleneck.4} parent=0 // pred_check
    _
  $region3: #{res_bottleneck.4} parent=0 // pred_check_branch
    %10 = sbr.rel (0) target = $region5
  $region4: #{res_bottleneck.4} parent=0 // pred_region
    _
  $region5: #{res_bottleneck.4} parent=0 // pred_fallthru
    _
  // Predicated region
  $region6: #{res_bottleneck.4} parent=0 // pred_check
    _
  $region7: #{res_bottleneck.4} parent=0 // pred_check_branch
    %12 = sbr.rel (0) target = $region9
  $region8: #{res_bottleneck.4} parent=0 // pred_region
    _
  $region9: #{res_bottleneck.4} parent=0 // pred_fallthru
    _
  %v13 = vld [vmem:[%s0] sm:$0xff]
  %v14 = vld [vmem:[%s0 + $0x8] sm:$0xff]
  %v15 = vld [vmem:[%s0 + $0x10] sm:$0xff]
  %v16 = vld [vmem:[%s0 + $0x18] sm:$0xff]
  %v17 = vld [vmem:[%s0 + $0x20] sm:$0xff]
  %v18 = vld [vmem:[%s0 + $0x28] sm:$0xff]
  %v19 = vld [vmem:[%s0 + $0x30] sm:$0xff]
  %v20 = vld [vmem:[%s0 + $0x38] sm:$0xff]
  %v21 = vld [vmem:[%s0 + $0x40] sm:$0xff]
  %v22 = vld [vmem:[%s0 + $0x48] sm:$0xff]
  %v23 = vld [vmem:[%s0 + $0x50] sm:$0xff]
  %v24 = vld [vmem:[%s0 + $0x58] sm:$0xff]
  %v25 = vld [vmem:[%s0 + $0x60] sm:$0xff]
  %v26 = vld [vmem:[%s0 + $0x68] sm:$0xff]
  %v27 = vld [vmem:[%s0 + $0x70] sm:$0xff]
  %v28 = vld [vmem:[%s0 + $0x78] sm:$0xff]
  %v29 = vld [vmem:[%s1] sm:$0xff]
  %v30 = vld [vmem:[%s1 + $0x8] sm:$0xff]
  %v31 = vld [vmem:[%s1 + $0x10] sm:$0xff]
  %v32 = vld [vmem:[%s1 + $0x18] sm:$0xff]
  %v33 = vld [vmem:[%s1 + $0x20] sm:$0xff]
  %v34 = vld [vmem:[%s1 + $0x28] sm:$0xff]
  %v35 = vld [vmem:[%s1 + $0x30] sm:$0xff]
  %v36 = vld [vmem:[%s1 + $0x38] sm:$0xff]
  %v37 = vld [vmem:[%s1 + $0x40] sm:$0xff]
  %v38 = vld [vmem:[%s1 + $0x48] sm:$0xff]
  %v39 = vld [vmem:[%s1 + $0x50] sm:$0xff]
  %v40 = vld [vmem:[%s1 + $0x58] sm:$0xff]
  %v41 = vld [vmem:[%s1 + $0x60] sm:$0xff]
  %v42 = vld [vmem:[%s1 + $0x68] sm:$0xff]
  %v43 = vld [vmem:[%s1 + $0x70] sm:$0xff]
  %v44 = vld [vmem:[%s1 + $0x78] sm:$0xff]
  %45 = vmatprep.subr.mxu0 0.0
  %46 = vmatpush1.msra.mxu0 %v44
  %47 = vmatprep.subr.mxu0 0.0
  %48 = vmatpush1.msra.mxu0 %v43
  %49 = vmatprep.subr.mxu0 0.0
  %50 = vmatpush1.msra.mxu0 %v42
  %51 = vmatprep.subr.mxu0 0.0
  %52 = vmatpush1.msra.mxu0 %v41
  %53 = vmatprep.subr.mxu0 0.0
  %54 = vmatpush1.msra.mxu0 %v40
  %55 = vmatprep.subr.mxu0 0.0
  %56 = vmatpush1.msra.mxu0 %v39
  %57 = vmatprep.subr.mxu0 0.0
  %58 = vmatpush1.msra.mxu0 %v38
  %59 = vmatprep.subr.mxu0 0.0
  %60 = vmatpush1.msra.mxu0 %v37
  %61 = vmatprep.subr.mxu0 0.0
  %62 = vmatpush1.msra.mxu0 %v36
  %63 = vmatprep.subr.mxu0 0.0
  %64 = vmatpush1.msra.mxu0 %v35
  %65 = vmatprep.subr.mxu0 0.0
  %66 = vmatpush1.msra.mxu0 %v34
  %67 = vmatprep.subr.mxu0 0.0
  %68 = vmatpush1.msra.mxu0 %v33
  %69 = vmatprep.subr.mxu0 0.0
  %70 = vmatpush1.msra.mxu0 %v32
  %71 = vmatprep.subr.mxu0 0.0
  %72 = vmatpush1.msra.mxu0 %v31
  %73 = vmatprep.subr.mxu0 0.0
  %74 = vmatpush1.msra.mxu0 %v30
  %75 = vmatprep.subr.mxu0 0.0
  %76 = vmatpush1.msra.mxu0 %v29
  %77 = vmatprep.subr.mxu0 0.0
  %78 = vmatpush2.msra.mxu0 0.0
  %79 = vmatprep.subr.mxu0 0.0
  %80 = vmatpush2.msra.mxu0 0.0
  %81 = vmatprep.subr.mxu0 0.0
  %82 = vmatpush2.msra.mxu0 0.0
  %83 = vmatprep.subr.mxu0 0.0
  %84 = vmatpush2.msra.mxu0 0.0
  %85 = vmatprep.subr.mxu0 0.0
  %86 = vmatpush2.msra.mxu0 0.0
  %87 = vmatprep.subr.mxu0 0.0
  %88 = vmatpush2.msra.mxu0 0.0
  %89 = vmatprep.subr.mxu0 0.0
  %90 = vmatpush2.msra.mxu0 0.0
  %91 = vmatprep.subr.mxu0 0.0
  %92 = vmatpush2.msra.mxu0 0.0
  %93 = vmatprep.subr.mxu0 0.0
  %94 = vmatpush2.msra.mxu0 0.0
  %95 = vmatprep.subr.mxu0 0.0
  %96 = vmatpush2.msra.mxu0 0.0
  %97 = vmatprep.subr.mxu0 0.0
  %98 = vmatpush2.msra.mxu0 0.0
  %99 = vmatprep.subr.mxu0 0.0
  %100 = vmatpush2.msra.mxu0 0.0
  %101 = vmatprep.subr.mxu0 0.0
  %102 = vmatpush2.msra.mxu0 0.0
  %103 = vmatprep.subr.mxu0 0.0
  %104 = vmatpush2.msra.mxu0 0.0
  %105 = vmatprep.subr.mxu0 0.0
  %106 = vmatpush2.msra.mxu0 0.0
  %107 = vmatprep.subr.mxu0 0.0
  %108 = vmatpush2.msra.mxu0 0.0
  %109 = vmatprep.mubr.f32.mxu0 0.0
  %110 = vmatmul.mubr.f32.gmra.mxu0 %v13
  %v111 = vpop.f32.mrf.mxu0
  %v112 = vadd.f32 0.0, %v111
  %v113 = vpop.f32.mrf.mxu0
  %114 = vmatprep.mubr.f32.mxu0 0.0
  %115 = vmatmul.mubr.f32.gmra.mxu0 %v14
  %v116 = vpop.f32.mrf.mxu0
  %v117 = vadd.f32 0.0, %v116
  %v118 = vpop.f32.mrf.mxu0
  %119 = vmatprep.mubr.f32.mxu0 0.0
  %120 = vmatmul.mubr.f32.gmra.mxu0 %v15
  %v121 = vpop.f32.mrf.mxu0
  %v122 = vadd.f32 0.0, %v121
  %v123 = vpop.f32.mrf.mxu0
  %124 = vmatprep.mubr.f32.mxu0 0.0
  %125 = vmatmul.mubr.f32.gmra.mxu0 %v16
  %v126 = vpop.f32.mrf.mxu0
  %v127 = vadd.f32 0.0, %v126
  %v128 = vpop.f32.mrf.mxu0
  %129 = vmatprep.mubr.f32.mxu0 0.0
  %130 = vmatmul.mubr.f32.gmra.mxu0 %v17
  %v131 = vpop.f32.mrf.mxu0
  %v132 = vadd.f32 0.0, %v131
  %v133 = vpop.f32.mrf.mxu0
  %134 = vmatprep.mubr.f32.mxu0 0.0
  %135 = vmatmul.mubr.f32.gmra.mxu0 %v18
  %v136 = vpop.f32.mrf.mxu0
  %v137 = vadd.f32 0.0, %v136
  %v138 = vpop.f32.mrf.mxu0
  %139 = vmatprep.mubr.f32.mxu0 0.0
  %140 = vmatmul.mubr.f32.gmra.mxu0 %v19
  %v141 = vpop.f32.mrf.mxu0
  %v142 = vadd.f32 0.0, %v141
  %v143 = vpop.f32.mrf.mxu0
  %144 = vmatprep.mubr.f32.mxu0 0.0
  %145 = vmatmul.mubr.f32.gmra.mxu0 %v20
  %v146 = vpop.f32.mrf.mxu0
  %v147 = vadd.f32 0.0, %v146
  %v148 = vpop.f32.mrf.mxu0
  %149 = vmatprep.mubr.f32.mxu0 0.0
  %150 = vmatmul.mubr.f32.gmra.mxu0 %v21
  %v151 = vpop.f32.mrf.mxu0
  %v152 = vadd.f32 0.0, %v151
  %v153 = vpop.f32.mrf.mxu0
  %154 = vmatprep.mubr.f32.mxu0 0.0
  %155 = vmatmul.mubr.f32.gmra.mxu0 %v22
  %v156 = vpop.f32.mrf.mxu0
  %v157 = vadd.f32 0.0, %v156
  %v158 = vpop.f32.mrf.mxu0
  %159 = vmatprep.mubr.f32.mxu0 0.0
  %160 = vmatmul.mubr.f32.gmra.mxu0 %v23
  %v161 = vpop.f32.mrf.mxu0
  %v162 = vadd.f32 0.0, %v161
  %v163 = vpop.f32.mrf.mxu0
  %164 = vmatprep.mubr.f32.mxu0 0.0
  %165 = vmatmul.mubr.f32.gmra.mxu0 %v24
  %v166 = vpop.f32.mrf.mxu0
  %v167 = vadd.f32 0.0, %v166
  %v168 = vpop.f32.mrf.mxu0
  %169 = vmatprep.mubr.f32.mxu0 0.0
  %170 = vmatmul.mubr.f32.gmra.mxu0 %v25
  %v171 = vpop.f32.mrf.mxu0
  %v172 = vadd.f32 0.0, %v171
  %v173 = vpop.f32.mrf.mxu0
  %174 = vmatprep.mubr.f32.mxu0 0.0
  %175 = vmatmul.mubr.f32.gmra.mxu0 %v26
  %v176 = vpop.f32.mrf.mxu0
  %v177 = vadd.f32 0.0, %v176
  %v178 = vpop.f32.mrf.mxu0
  %179 = vmatprep.mubr.f32.mxu0 0.0
  %180 = vmatmul.mubr.f32.gmra.mxu0 %v27
  %v181 = vpop.f32.mrf.mxu0
  %v182 = vadd.f32 0.0, %v181
  %v183 = vpop.f32.mrf.mxu0
  %184 = vmatprep.mubr.f32.mxu0 0.0
  %185 = vmatmul.mubr.f32.gmra.mxu0 %v28
  %v186 = vpop.f32.mrf.mxu0
  %v187 = vadd.f32 0.0, %v186
  %v188 = vpop.f32.mrf.mxu0
  %189 = vdwg.mxu0
  %190 = vst [vmem:[%s2] sm:$0xff] %v112
  %191 = vst [vmem:[%s2 + $0x8] sm:$0xff] %v117
  %192 = vst [vmem:[%s2 + $0x10] sm:$0xff] %v122
  %193 = vst [vmem:[%s2 + $0x18] sm:$0xff] %v127
  %194 = vst [vmem:[%s2 + $0x20] sm:$0xff] %v132
  %195 = vst [vmem:[%s2 + $0x28] sm:$0xff] %v137
  %196 = vst [vmem:[%s2 + $0x30] sm:$0xff] %v142
  %197 = vst [vmem:[%s2 + $0x38] sm:$0xff] %v147
  %198 = vst [vmem:[%s2 + $0x40] sm:$0xff] %v152
  %199 = vst [vmem:[%s2 + $0x48] sm:$0xff] %v157
  %200 = vst [vmem:[%s2 + $0x50] sm:$0xff] %v162
  %201 = vst [vmem:[%s2 + $0x58] sm:$0xff] %v167
  %202 = vst [vmem:[%s2 + $0x60] sm:$0xff] %v172
  %203 = vst [vmem:[%s2 + $0x68] sm:$0xff] %v177
  %204 = vst [vmem:[%s2 + $0x70] sm:$0xff] %v182
  %205 = vst [vmem:[%s2 + $0x78] sm:$0xff] %v187
  %v206 = vadd.f32 %v112, %v117
  %v207 = vadd.f32 %v206, %v122
  %v208 = vadd.f32 %v207, %v127
  %v209 = vadd.f32 %v208, %v132
  %v210 = vadd.f32 %v209, %v137
  %v211 = vadd.f32 %v210, %v142
  %v212 = vadd.f32 %v211, %v147
  %v213 = vadd.f32 %v212, %v152
  %v214 = vadd.f32 %v213, %v157
  %v215 = vadd.f32 %v214, %v162
  %v216 = vadd.f32 %v215, %v167
  %v217 = vadd.f32 %v216, %v172
  %v218 = vadd.f32 %v217, %v177
  %v219 = vadd.f32 %v218, %v182
  %v220 = vadd.f32 %v219, %v187
  %v221 = vrot.slane %v220, 4
  %v222 = vadd.f32 %v220, %v221
  %v223 = vrot.slane %v222, 2
  %v224 = vadd.f32 %v222, %v223
  %v225 = vrot.slane %v224, 1
  %v226 = vadd.f32 %v224, %v225
  %v227 = vmul.f32 %v112, %v112
  %v228 = vmul.f32 %v117, %v117
  %v229 = vmul.f32 %v122, %v122
  %v230 = vmul.f32 %v127, %v127
  %v231 = vmul.f32 %v132, %v132
  %v232 = vmul.f32 %v137, %v137
  %v233 = vmul.f32 %v142, %v142
  %v234 = vmul.f32 %v147, %v147
  %v235 = vmul.f32 %v152, %v152
  %v236 = vmul.f32 %v157, %v157
  %v237 = vmul.f32 %v162, %v162
  %v238 = vmul.f32 %v167, %v167
  %v239 = vmul.f32 %v172, %v172
  %v240 = vmul.f32 %v177, %v177
  %v241 = vmul.f32 %v182, %v182
  %v242 = vmul.f32 %v187, %v187
  %v243 = vadd.f32 %v227, %v228
  %v244 = vadd.f32 %v243, %v229
  %v245 = vadd.f32 %v244, %v230
  %v246 = vadd.f32 %v245, %v231
  %v247 = vadd.f32 %v246, %v232
  %v248 = vadd.f32 %v247, %v233
  %v249 = vadd.f32 %v248, %v234
  %v250 = vadd.f32 %v249, %v235
  %v251 = vadd.f32 %v250, %v236
  %v252 = vadd.f32 %v251, %v237
  %v253 = vadd.f32 %v252, %v238
  %v254 = vadd.f32 %v253, %v239
  %v255 = vadd.f32 %v254, %v240
  %v256 = vadd.f32 %v255, %v241
  %v257 = vadd.f32 %v256, %v242
  %v258 = vrot.slane %v257, 4
  %v259 = vadd.f32 %v257, %v258
  %v260 = vrot.slane %v259, 2
  %v261 = vadd.f32 %v259, %v260
  %v262 = vrot.slane %v261, 1
  %v263 = vadd.f32 %v261, %v262
  %vm264 = vcmask 1040384
  %v265 = vsel %vm264, %v226, %v263
  %266 = vst [vmem:[%s3] sm:$0x3] %v265
  // Predicated region
  $region10: #{res_bottleneck.4} parent=0 // pred_check
    _
  $region11: #{res_bottleneck.4} parent=0 // pred_check_branch
    %268 = sbr.rel (0) target = $region13
  $region12: #{res_bottleneck.4} parent=0 // pred_region
    _
  $region13: #{res_bottleneck.4} parent=0 // pred_fallthru
    _
  // Predicated region
  $region14: #{res_bottleneck.4} parent=0 // pred_check
    _
  $region15: #{res_bottleneck.4} parent=0 // pred_check_branch
    %270 = sbr.rel (0) target = $region17
  $region16: #{res_bottleneck.4} parent=0 // pred_region
    _
  $region17: #{res_bottleneck.4} parent=0 // pred_fallthru
    _
  // Predicated region
  $region18: #{res_bottleneck.4} parent=0 // pred_check
    _
  $region19: #{res_bottleneck.4} parent=0 // pred_check_branch
    %272 = sbr.rel (0) target = $region21
  $region20: #{res_bottleneck.4} parent=0 // pred_region
    _
  $region21: #{res_bottleneck.4} parent=0 // pred_fallthru
    _
  // Predicated region
  $region22: #{res_bottleneck.4} parent=0 // pred_check
    _
  $region23: #{res_bottleneck.4} parent=0 // pred_check_branch
    %274 = sbr.rel (0) target = $region25
  $region24: #{res_bottleneck.4} parent=0 // pred_region
    _
  $region25: #{res_bottleneck.4} parent=0 // pred_fallthru
    _

// kernel: res_bottleneck.7
$region0: #{res_bottleneck.7}
  #allocation0 [shape = 'u32[]', space=smem, size = 0x4, offset = 0x4, fixed_abs, tag = 'smem constant byte address 0x4 - core index']
  #allocation1 [shape = 'u32[144,128]{1,0:T(1,128)}', space=vmem, size = 0x12000, scoped, tag = 'internal scratch']
  %s0 = inlined_call_operand.vmem [shape: f32[2,8,8,128], index: 0, kind: input, shape index: {}]
  %s1 = inlined_call_operand.vmem [shape: f32[2,8,8,128], index: 1, kind: input, shape index: {}]
  %s2 = inlined_call_operand.vmem [shape: f32[1,128], index: 2, kind: input, shape index: {}]
  %s3 = inlined_call_operand.vmem [shape: f32[1,128], index: 3, kind: input, shape index: {}]
  %s4 = inlined_call_operand.hbm [shape: f32[2,8,8,128], index: 4, kind: output, shape index: {}]
  %s5 = sld [smem:[#allocation0]]
  $region26: #{res_bottleneck.7} parent=0
    _
  %s7 = ssub.s32 1, %s5
  %s8 = scalar_select 0, %s7, %s5
  $region1: #{res_bottleneck.7} parent=0
    #allocation2 [shape = 'u8[65536]{0}', space=vmem, size = 0x10000, scoped, tag = 'output window, operand 0, single buffered']
    #allocation3 [shape = 's32[1]{0}', space=sflag, size = 0x4, scoped, tag = 'scoped memory for res_bottleneck.7']
    %9 = vsyncpa [#allocation3], 0
    // Predicated region
    $region2: #{res_bottleneck.7} parent=1 // pred_check
      _
    $region3: #{res_bottleneck.7} parent=1 // pred_check_branch
      %11 = sbr.rel (0) target = $region5
    $region4: #{res_bottleneck.7} parent=1 // pred_region
      _
    $region5: #{res_bottleneck.7} parent=1 // pred_fallthru
      _
    // Predicated region
    $region6: #{res_bottleneck.7} parent=1 // pred_check
      _
    $region7: #{res_bottleneck.7} parent=1 // pred_check_branch
      %13 = sbr.rel (0) target = $region9
    $region8: #{res_bottleneck.7} parent=1 // pred_region
      _
    $region9: #{res_bottleneck.7} parent=1 // pred_fallthru
      _
    // Predicated region
    $region10: #{res_bottleneck.7} parent=1 // pred_check
      _
    $region11: #{res_bottleneck.7} parent=1 // pred_check_branch
      %15 = sbr.rel (0) target = $region13
    $region12: #{res_bottleneck.7} parent=1 // pred_region
      _
    $region13: #{res_bottleneck.7} parent=1 // pred_fallthru
      _
    // Predicated region
    $region14: #{res_bottleneck.7} parent=1 // pred_check
      _
    $region15: #{res_bottleneck.7} parent=1 // pred_check_branch
      %17 = sbr.rel (0) target = $region17
    $region16: #{res_bottleneck.7} parent=1 // pred_region
      _
    $region17: #{res_bottleneck.7} parent=1 // pred_fallthru
      _
    %v18 = vld [vmem:[%s0] sm:$0xff]
    %v19 = vld [vmem:[%s0 + $0x8] sm:$0xff]
    %v20 = vld [vmem:[%s0 + $0x10] sm:$0xff]
    %v21 = vld [vmem:[%s0 + $0x18] sm:$0xff]
    %v22 = vld [vmem:[%s0 + $0x20] sm:$0xff]
    %v23 = vld [vmem:[%s0 + $0x28] sm:$0xff]
    %v24 = vld [vmem:[%s0 + $0x30] sm:$0xff]
    %v25 = vld [vmem:[%s0 + $0x38] sm:$0xff]
    %v26 = vld [vmem:[%s0 + $0x40] sm:$0xff]
    %v27 = vld [vmem:[%s0 + $0x48] sm:$0xff]
    %v28 = vld [vmem:[%s0 + $0x50] sm:$0xff]
    %v29 = vld [vmem:[%s0 + $0x58] sm:$0xff]
    %v30 = vld [vmem:[%s0 + $0x60] sm:$0xff]
    %v31 = vld [vmem:[%s0 + $0x68] sm:$0xff]
    %v32 = vld [vmem:[%s0 + $0x70] sm:$0xff]
    %v33 = vld [vmem:[%s0 + $0x78] sm:$0xff]
    %v34 = vld [vmem:[%s2] sm:$0x1]
    %v36 = vlaneseq
    %v37 = vshrl.u32 %v36, 7
    %v38 = vsub.s32 0, %v37
    %v39 = vrot.slane %v34, %v38
    %v41 = vmul.f32 %v18, %v39
    %v42 = vmul.f32 %v19, %v39
    %v43 = vmul.f32 %v20, %v39
    %v44 = vmul.f32 %v21, %v39
    %v45 = vmul.f32 %v22, %v39
    %v46 = vmul.f32 %v23, %v39
    %v47 = vmul.f32 %v24, %v39
    %v48 = vmul.f32 %v25, %v39
    %v49 = vmul.f32 %v26, %v39
    %v50 = vmul.f32 %v27, %v39
    %v51 = vmul.f32 %v28, %v39
    %v52 = vmul.f32 %v29, %v39
    %v53 = vmul.f32 %v30, %v39
    %v54 = vmul.f32 %v31, %v39
    %v55 = vmul.f32 %v32, %v39
    %v56 = vmul.f32 %v33, %v39
    %v57 = vld [vmem:[%s3] sm:$0x1]
    %v59 = vlaneseq
    %v60 = vshrl.u32 %v59, 7
    %v61 = vsub.s32 0, %v60
    %v62 = vrot.slane %v57, %v61
    %v64 = vadd.f32 %v41, %v62
    %v65 = vadd.f32 %v42, %v62
    %v66 = vadd.f32 %v43, %v62
    %v67 = vadd.f32 %v44, %v62
    %v68 = vadd.f32 %v45, %v62
    %v69 = vadd.f32 %v46, %v62
    %v70 = vadd.f32 %v47, %v62
    %v71 = vadd.f32 %v48, %v62
    %v72 = vadd.f32 %v49, %v62
    %v73 = vadd.f32 %v50, %v62
    %v74 = vadd.f32 %v51, %v62
    %v75 = vadd.f32 %v52, %v62
    %v76 = vadd.f32 %v53, %v62
    %v77 = vadd.f32 %v54, %v62
    %v78 = vadd.f32 %v55, %v62
    %v79 = vadd.f32 %v56, %v62
    %v80 = vld [vmem:[%s1] sm:$0xff]
    %v81 = vld [vmem:[%s1 + $0x8] sm:$0xff]
    %v82 = vld [vmem:[%s1 + $0x10] sm:$0xff]
    %v83 = vld [vmem:[%s1 + $0x18] sm:$0xff]
    %v84 = vld [vmem:[%s1 + $0x20] sm:$0xff]
    %v85 = vld [vmem:[%s1 + $0x28] sm:$0xff]
    %v86 = vld [vmem:[%s1 + $0x30] sm:$0xff]
    %v87 = vld [vmem:[%s1 + $0x38] sm:$0xff]
    %v88 = vld [vmem:[%s1 + $0x40] sm:$0xff]
    %v89 = vld [vmem:[%s1 + $0x48] sm:$0xff]
    %v90 = vld [vmem:[%s1 + $0x50] sm:$0xff]
    %v91 = vld [vmem:[%s1 + $0x58] sm:$0xff]
    %v92 = vld [vmem:[%s1 + $0x60] sm:$0xff]
    %v93 = vld [vmem:[%s1 + $0x68] sm:$0xff]
    %v94 = vld [vmem:[%s1 + $0x70] sm:$0xff]
    %v95 = vld [vmem:[%s1 + $0x78] sm:$0xff]
    %v96 = vadd.f32 %v64, %v80
    %v97 = vadd.f32 %v65, %v81
    %v98 = vadd.f32 %v66, %v82
    %v99 = vadd.f32 %v67, %v83
    %v100 = vadd.f32 %v68, %v84
    %v101 = vadd.f32 %v69, %v85
    %v102 = vadd.f32 %v70, %v86
    %v103 = vadd.f32 %v71, %v87
    %v104 = vadd.f32 %v72, %v88
    %v105 = vadd.f32 %v73, %v89
    %v106 = vadd.f32 %v74, %v90
    %v107 = vadd.f32 %v75, %v91
    %v108 = vadd.f32 %v76, %v92
    %v109 = vadd.f32 %v77, %v93
    %v110 = vadd.f32 %v78, %v94
    %v111 = vadd.f32 %v79, %v95
    %v112 = vmax.f32 %v96, 0.0
    %v113 = vmax.f32 %v97, 0.0
    %v114 = vmax.f32 %v98, 0.0
    %v115 = vmax.f32 %v99, 0.0
    %v116 = vmax.f32 %v100, 0.0
    %v117 = vmax.f32 %v101, 0.0
    %v118 = vmax.f32 %v102, 0.0
    %v119 = vmax.f32 %v103, 0.0
    %v120 = vmax.f32 %v104, 0.0
    %v121 = vmax.f32 %v105, 0.0
    %v122 = vmax.f32 %v106, 0.0
    %v123 = vmax.f32 %v107, 0.0
    %v124 = vmax.f32 %v108, 0.0
    %v125 = vmax.f32 %v109, 0.0
    %v126 = vmax.f32 %v110, 0.0
    %v127 = vmax.f32 %v111, 0.0
    %128 = vst [vmem:[#allocation2] sm:$0xff] %v112
    %129 = vst [vmem:[#allocation2 + $0x8] sm:$0xff] %v113
    %130 = vst [vmem:[#allocation2 + $0x10] sm:$0xff] %v114
    %131 = vst [vmem:[#allocation2 + $0x18] sm:$0xff] %v115
    %132 = vst [vmem:[#allocation2 + $0x20] sm:$0xff] %v116
    %133 = vst [vmem:[#allocation2 + $0x28] sm:$0xff] %v117
    %134 = vst [vmem:[#allocation2 + $0x30] sm:$0xff] %v118
    %135 = vst [vmem:[#allocation2 + $0x38] sm:$0xff] %v119
    %136 = vst [vmem:[#allocation2 + $0x40] sm:$0xff] %v120
    %137 = vst [vmem:[#allocation2 + $0x48] sm:$0xff] %v121
    %138 = vst [vmem:[#allocation2 + $0x50] sm:$0xff] %v122
    %139 = vst [vmem:[#allocation2 + $0x58] sm:$0xff] %v123
    %140 = vst [vmem:[#allocation2 + $0x60] sm:$0xff] %v124
    %141 = vst [vmem:[#allocation2 + $0x68] sm:$0xff] %v125
    %142 = vst [vmem:[#allocation2 + $0x70] sm:$0xff] %v126
    %143 = vst [vmem:[#allocation2 + $0x78] sm:$0xff] %v127
    // Predicated region
    $region18: #{res_bottleneck.7} parent=1 // pred_check
      _
    $region19: #{res_bottleneck.7} parent=1 // pred_check_branch
      %145 = sbr.rel (0) target = $region21
    $region20: #{res_bottleneck.7} parent=1 // pred_region
      %s147 = ssub.s32 2048, 2048
      %148 = vsyncadd [#allocation3], %s147
      %s149 = sshll.u32 [#allocation2], 4
      %s150 = int_to_ptr.vmem [resolvable:$true] %s149
      %155 = dma.vmem_to_hbm [thread:$0]  %s150, 2048, %s4, [#allocation3], 128, 128, 8
    $region21: #{res_bottleneck.7} parent=1 // pred_fallthru
      _
    // Predicated region
    $region22: #{res_bottleneck.7} parent=1 // pred_check
      _
    $region23: #{res_bottleneck.7} parent=1 // pred_check_branch
      %157 = sbr.rel (0) target = $region25
    $region24: #{res_bottleneck.7} parent=1 // pred_region
      %158 = dma.done [#allocation3], 2048
    $region25: #{res_bottleneck.7} parent=1 // pred_fallthru
      _
    %159 = vsyncpa [#allocation3], 1

// kernel: res_bottleneck.6
$region0: #{res_bottleneck.6}
  #allocation0 [shape = 'u32[]', space=smem, size = 0x4, offset = 0x4, fixed_abs, tag = 'smem constant byte address 0x4 - core index']
  #allocation1 [shape = 'u32[144,128]{1,0:T(1,128)}', space=vmem, size = 0x12000, scoped, tag = 'internal scratch']
  %s0 = inlined_call_operand.vmem [shape: f32[2,8,8,128], index: 0, kind: input, shape index: {}]
  %s1 = inlined_call_operand.vmem [shape: f32[1,128], index: 1, kind: input, shape index: {}]
  %s2 = inlined_call_operand.vmem [shape: f32[1,128], index: 2, kind: input, shape index: {}]
  %s3 = inlined_call_operand.vmem [shape: f32[128,128], index: 3, kind: input, shape index: {}]
  %s4 = inlined_call_operand.vmem [shape: f32[2,8,8,128], index: 4, kind: output, shape index: {0}]
  %s5 = inlined_call_operand.vmem [shape: f32[1,2,128], index: 5, kind: output, shape index: {1}]
  %6 = xla_tuple %s4, %s5
  %s7 = sld [smem:[#allocation0]]
  $region34: #{res_bottleneck.6} parent=0
    _
  %s9 = ssub.s32 1, %s7
  %s10 = scalar_select 0, %s9, %s7
  // Predicated region
  $region2: #{res_bottleneck.6} parent=0 // pred_check
    _
  $region3: #{res_bottleneck.6} parent=0 // pred_check_branch
    %12 = sbr.rel (0) target = $region5
  $region4: #{res_bottleneck.6} parent=0 // pred_region
    _
  $region5: #{res_bottleneck.6} parent=0 // pred_fallthru
    _
  // Predicated region
  $region6: #{res_bottleneck.6} parent=0 // pred_check
    _
  $region7: #{res_bottleneck.6} parent=0 // pred_check_branch
    %14 = sbr.rel (0) target = $region9
  $region8: #{res_bottleneck.6} parent=0 // pred_region
    _
  $region9: #{res_bottleneck.6} parent=0 // pred_fallthru
    _
  // Predicated region
  $region10: #{res_bottleneck.6} parent=0 // pred_check
    _
  $region11: #{res_bottleneck.6} parent=0 // pred_check_branch
    %16 = sbr.rel (0) target = $region13
  $region12: #{res_bottleneck.6} parent=0 // pred_region
    _
  $region13: #{res_bottleneck.6} parent=0 // pred_fallthru
    _
  // Predicated region
  $region14: #{res_bottleneck.6} parent=0 // pred_check
    _
  $region15: #{res_bottleneck.6} parent=0 // pred_check_branch
    %18 = sbr.rel (0) target = $region17
  $region16: #{res_bottleneck.6} parent=0 // pred_region
    _
  $region17: #{res_bottleneck.6} parent=0 // pred_fallthru
    _
  %v19 = vld [vmem:[%s0] sm:$0xff]
  %v20 = vld [vmem:[%s0 + $0x8] sm:$0xff]
  %v21 = vld [vmem:[%s0 + $0x10] sm:$0xff]
  %v22 = vld [vmem:[%s0 + $0x18] sm:$0xff]
  %v23 = vld [vmem:[%s0 + $0x20] sm:$0xff]
  %v24 = vld [vmem:[%s0 + $0x28] sm:$0xff]
  %v25 = vld [vmem:[%s0 + $0x30] sm:$0xff]
  %v26 = vld [vmem:[%s0 + $0x38] sm:$0xff]
  %v27 = vld [vmem:[%s0 + $0x40] sm:$0xff]
  %v28 = vld [vmem:[%s0 + $0x48] sm:$0xff]
  %v29 = vld [vmem:[%s0 + $0x50] sm:$0xff]
  %v30 = vld [vmem:[%s0 + $0x58] sm:$0xff]
  %v31 = vld [vmem:[%s0 + $0x60] sm:$0xff]
  %v32 = vld [vmem:[%s0 + $0x68] sm:$0xff]
  %v33 = vld [vmem:[%s0 + $0x70] sm:$0xff]
  %v34 = vld [vmem:[%s0 + $0x78] sm:$0xff]
  %v35 = vld [vmem:[%s1] sm:$0x1]
  %v37 = vlaneseq
  %v38 = vshrl.u32 %v37, 7
  %v39 = vsub.s32 0, %v38
  %v40 = vrot.slane %v35, %v39
  %v42 = vmul.f32 %v19, %v40
  %v43 = vmul.f32 %v20, %v40
  %v44 = vmul.f32 %v21, %v40
  %v45 = vmul.f32 %v22, %v40
  %v46 = vmul.f32 %v23, %v40
  %v47 = vmul.f32 %v24, %v40
  %v48 = vmul.f32 %v25, %v40
  %v49 = vmul.f32 %v26, %v40
  %v50 = vmul.f32 %v27, %v40
  %v51 = vmul.f32 %v28, %v40
  %v52 = vmul.f32 %v29, %v40
  %v53 = vmul.f32 %v30, %v40
  %v54 = vmul.f32 %v31, %v40
  %v55 = vmul.f32 %v32, %v40
  %v56 = vmul.f32 %v33, %v40
  %v57 = vmul.f32 %v34, %v40
  %v58 = vld [vmem:[%s2] sm:$0x1]
  %v60 = vlaneseq
  %v61 = vshrl.u32 %v60, 7
  %v62 = vsub.s32 0, %v61
  %v63 = vrot.slane %v58, %v62
  %v65 = vadd.f32 %v42, %v63
  %v66 = vadd.f32 %v43, %v63
  %v67 = vadd.f32 %v44, %v63
  %v68 = vadd.f32 %v45, %v63
  %v69 = vadd.f32 %v46, %v63
  %v70 = vadd.f32 %v47, %v63
  %v71 = vadd.f32 %v48, %v63
  %v72 = vadd.f32 %v49, %v63
  %v73 = vadd.f32 %v50, %v63
  %v74 = vadd.f32 %v51, %v63
  %v75 = vadd.f32 %v52, %v63
  %v76 = vadd.f32 %v53, %v63
  %v77 = vadd.f32 %v54, %v63
  %v78 = vadd.f32 %v55, %v63
  %v79 = vadd.f32 %v56, %v63
  %v80 = vadd.f32 %v57, %v63
  %v81 = vmax.f32 %v65, 0.0
  %v82 = vmax.f32 %v66, 0.0
  %v83 = vmax.f32 %v67, 0.0
  %v84 = vmax.f32 %v68, 0.0
  %v85 = vmax.f32 %v69, 0.0
  %v86 = vmax.f32 %v70, 0.0
  %v87 = vmax.f32 %v71, 0.0
  %v88 = vmax.f32 %v72, 0.0
  %v89 = vmax.f32 %v73, 0.0
  %v90 = vmax.f32 %v74, 0.0
  %v91 = vmax.f32 %v75, 0.0
  %v92 = vmax.f32 %v76, 0.0
  %v93 = vmax.f32 %v77, 0.0
  %v94 = vmax.f32 %v78, 0.0
  %v95 = vmax.f32 %v79, 0.0
  %v96 = vmax.f32 %v80, 0.0
  %v97 = vld [vmem:[%s3] sm:$0xff]
  %v98 = vld [vmem:[%s3 + $0x8] sm:$0xff]
  %v99 = vld [vmem:[%s3 + $0x10] sm:$0xff]
  %v100 = vld [vmem:[%s3 + $0x18] sm:$0xff]
  %v101 = vld [vmem:[%s3 + $0x20] sm:$0xff]
  %v102 = vld [vmem:[%s3 + $0x28] sm:$0xff]
  %v103 = vld [vmem:[%s3 + $0x30] sm:$0xff]
  %v104 = vld [vmem:[%s3 + $0x38] sm:$0xff]
  %v105 = vld [vmem:[%s3 + $0x40] sm:$0xff]
  %v106 = vld [vmem:[%s3 + $0x48] sm:$0xff]
  %v107 = vld [vmem:[%s3 + $0x50] sm:$0xff]
  %v108 = vld [vmem:[%s3 + $0x58] sm:$0xff]
  %v109 = vld [vmem:[%s3 + $0x60] sm:$0xff]
  %v110 = vld [vmem:[%s3 + $0x68] sm:$0xff]
  %v111 = vld [vmem:[%s3 + $0x70] sm:$0xff]
  %v112 = vld [vmem:[%s3 + $0x78] sm:$0xff]
  %113 = vmatprep.subr.mxu0 0.0
  %114 = vmatpush1.msra.mxu0 %v112
  %115 = vmatprep.subr.mxu0 0.0
  %116 = vmatpush1.msra.mxu0 %v111
  %117 = vmatprep.subr.mxu0 0.0
  %118 = vmatpush1.msra.mxu0 %v110
  %119 = vmatprep.subr.mxu0 0.0
  %120 = vmatpush1.msra.mxu0 %v109
  %121 = vmatprep.subr.mxu0 0.0
  %122 = vmatpush1.msra.mxu0 %v108
  %123 = vmatprep.subr.mxu0 0.0
  %124 = vmatpush1.msra.mxu0 %v107
  %125 = vmatprep.subr.mxu0 0.0
  %126 = vmatpush1.msra.mxu0 %v106
  %127 = vmatprep.subr.mxu0 0.0
  %128 = vmatpush1.msra.mxu0 %v105
  %129 = vmatprep.subr.mxu0 0.0
  %130 = vmatpush1.msra.mxu0 %v104
  %131 = vmatprep.subr.mxu0 0.0
  %132 = vmatpush1.msra.mxu0 %v103
  %133 = vmatprep.subr.mxu0 0.0
  %134 = vmatpush1.msra.mxu0 %v102
  %135 = vmatprep.subr.mxu0 0.0
  %136 = vmatpush1.msra.mxu0 %v101
  %137 = vmatprep.subr.mxu0 0.0
  %138 = vmatpush1.msra.mxu0 %v100
  %139 = vmatprep.subr.mxu0 0.0
  %140 = vmatpush1.msra.mxu0 %v99
  %141 = vmatprep.subr.mxu0 0.0
  %142 = vmatpush1.msra.mxu0 %v98
  %143 = vmatprep.subr.mxu0 0.0
  %144 = vmatpush1.msra.mxu0 %v97
  %145 = vmatprep.subr.mxu0 0.0
  %146 = vmatpush2.msra.mxu0 0.0
  %147 = vmatprep.subr.mxu0 0.0
  %148 = vmatpush2.msra.mxu0 0.0
  %149 = vmatprep.subr.mxu0 0.0
  %150 = vmatpush2.msra.mxu0 0.0
  %151 = vmatprep.subr.mxu0 0.0
  %152 = vmatpush2.msra.mxu0 0.0
  %153 = vmatprep.subr.mxu0 0.0
  %154 = vmatpush2.msra.mxu0 0.0
  %155 = vmatprep.subr.mxu0 0.0
  %156 = vmatpush2.msra.mxu0 0.0
  %157 = vmatprep.subr.mxu0 0.0
  %158 = vmatpush2.msra.mxu0 0.0
  %159 = vmatprep.subr.mxu0 0.0
  %160 = vmatpush2.msra.mxu0 0.0
  %161 = vmatprep.subr.mxu0 0.0
  %162 = vmatpush2.msra.mxu0 0.0
  %163 = vmatprep.subr.mxu0 0.0
  %164 = vmatpush2.msra.mxu0 0.0
  %165 = vmatprep.subr.mxu0 0.0
  %166 = vmatpush2.msra.mxu0 0.0
  %167 = vmatprep.subr.mxu0 0.0
  %168 = vmatpush2.msra.mxu0 0.0
  %169 = vmatprep.subr.mxu0 0.0
  %170 = vmatpush2.msra.mxu0 0.0
  %171 = vmatprep.subr.mxu0 0.0
  %172 = vmatpush2.msra.mxu0 0.0
  %173 = vmatprep.subr.mxu0 0.0
  %174 = vmatpush2.msra.mxu0 0.0
  %175 = vmatprep.subr.mxu0 0.0
  %176 = vmatpush2.msra.mxu0 0.0
  %177 = vmatprep.mubr.f32.mxu0 0.0
  %178 = vmatmul.mubr.f32.gmra.mxu0 %v81
  %v179 = vpop.f32.mrf.mxu0
  %v180 = vadd.f32 0.0, %v179
  %v181 = vpop.f32.mrf.mxu0
  %182 = vmatprep.mubr.f32.mxu0 0.0
  %183 = vmatmul.mubr.f32.gmra.mxu0 %v82
  %v184 = vpop.f32.mrf.mxu0
  %v185 = vadd.f32 0.0, %v184
  %v186 = vpop.f32.mrf.mxu0
  %187 = vmatprep.mubr.f32.mxu0 0.0
  %188 = vmatmul.mubr.f32.gmra.mxu0 %v83
  %v189 = vpop.f32.mrf.mxu0
  %v190 = vadd.f32 0.0, %v189
  %v191 = vpop.f32.mrf.mxu0
  %192 = vmatprep.mubr.f32.mxu0 0.0
  %193 = vmatmul.mubr.f32.gmra.mxu0 %v84
  %v194 = vpop.f32.mrf.mxu0
  %v195 = vadd.f32 0.0, %v194
  %v196 = vpop.f32.mrf.mxu0
  %197 = vmatprep.mubr.f32.mxu0 0.0
  %198 = vmatmul.mubr.f32.gmra.mxu0 %v85
  %v199 = vpop.f32.mrf.mxu0
  %v200 = vadd.f32 0.0, %v199
  %v201 = vpop.f32.mrf.mxu0
  %202 = vmatprep.mubr.f32.mxu0 0.0
  %203 = vmatmul.mubr.f32.gmra.mxu0 %v86
  %v204 = vpop.f32.mrf.mxu0
  %v205 = vadd.f32 0.0, %v204
  %v206 = vpop.f32.mrf.mxu0
  %207 = vmatprep.mubr.f32.mxu0 0.0
  %208 = vmatmul.mubr.f32.gmra.mxu0 %v87
  %v209 = vpop.f32.mrf.mxu0
  %v210 = vadd.f32 0.0, %v209
  %v211 = vpop.f32.mrf.mxu0
  %212 = vmatprep.mubr.f32.mxu0 0.0
  %213 = vmatmul.mubr.f32.gmra.mxu0 %v88
  %v214 = vpop.f32.mrf.mxu0
  %v215 = vadd.f32 0.0, %v214
  %v216 = vpop.f32.mrf.mxu0
  %217 = vmatprep.mubr.f32.mxu0 0.0
  %218 = vmatmul.mubr.f32.gmra.mxu0 %v89
  %v219 = vpop.f32.mrf.mxu0
  %v220 = vadd.f32 0.0, %v219
  %v221 = vpop.f32.mrf.mxu0
  %222 = vmatprep.mubr.f32.mxu0 0.0
  %223 = vmatmul.mubr.f32.gmra.mxu0 %v90
  %v224 = vpop.f32.mrf.mxu0
  %v225 = vadd.f32 0.0, %v224
  %v226 = vpop.f32.mrf.mxu0
  %227 = vmatprep.mubr.f32.mxu0 0.0
  %228 = vmatmul.mubr.f32.gmra.mxu0 %v91
  %v229 = vpop.f32.mrf.mxu0
  %v230 = vadd.f32 0.0, %v229
  %v231 = vpop.f32.mrf.mxu0
  %232 = vmatprep.mubr.f32.mxu0 0.0
  %233 = vmatmul.mubr.f32.gmra.mxu0 %v92
  %v234 = vpop.f32.mrf.mxu0
  %v235 = vadd.f32 0.0, %v234
  %v236 = vpop.f32.mrf.mxu0
  %237 = vmatprep.mubr.f32.mxu0 0.0
  %238 = vmatmul.mubr.f32.gmra.mxu0 %v93
  %v239 = vpop.f32.mrf.mxu0
  %v240 = vadd.f32 0.0, %v239
  %v241 = vpop.f32.mrf.mxu0
  %242 = vmatprep.mubr.f32.mxu0 0.0
  %243 = vmatmul.mubr.f32.gmra.mxu0 %v94
  %v244 = vpop.f32.mrf.mxu0
  %v245 = vadd.f32 0.0, %v244
  %v246 = vpop.f32.mrf.mxu0
  %247 = vmatprep.mubr.f32.mxu0 0.0
  %248 = vmatmul.mubr.f32.gmra.mxu0 %v95
  %v249 = vpop.f32.mrf.mxu0
  %v250 = vadd.f32 0.0, %v249
  %v251 = vpop.f32.mrf.mxu0
  %252 = vmatprep.mubr.f32.mxu0 0.0
  %253 = vmatmul.mubr.f32.gmra.mxu0 %v96
  %v254 = vpop.f32.mrf.mxu0
  %v255 = vadd.f32 0.0, %v254
  %v256 = vpop.f32.mrf.mxu0
  %257 = vdwg.mxu0
  %258 = vst [vmem:[%s4] sm:$0xff] %v180
  %259 = vst [vmem:[%s4 + $0x8] sm:$0xff] %v185
  %260 = vst [vmem:[%s4 + $0x10] sm:$0xff] %v190
  %261 = vst [vmem:[%s4 + $0x18] sm:$0xff] %v195
  %262 = vst [vmem:[%s4 + $0x20] sm:$0xff] %v200
  %263 = vst [vmem:[%s4 + $0x28] sm:$0xff] %v205
  %264 = vst [vmem:[%s4 + $0x30] sm:$0xff] %v210
  %265 = vst [vmem:[%s4 + $0x38] sm:$0xff] %v215
  %266 = vst [vmem:[%s4 + $0x40] sm:$0xff] %v220
  %267 = vst [vmem:[%s4 + $0x48] sm:$0xff] %v225
  %268 = vst [vmem:[%s4 + $0x50] sm:$0xff] %v230
  %269 = vst [vmem:[%s4 + $0x58] sm:$0xff] %v235
  %270 = vst [vmem:[%s4 + $0x60] sm:$0xff] %v240
  %271 = vst [vmem:[%s4 + $0x68] sm:$0xff] %v245
  %272 = vst [vmem:[%s4 + $0x70] sm:$0xff] %v250
  %273 = vst [vmem:[%s4 + $0x78] sm:$0xff] %v255
  %v274 = vadd.f32 %v180, %v185
  %v275 = vadd.f32 %v274, %v190
  %v276 = vadd.f32 %v275, %v195
  %v277 = vadd.f32 %v276, %v200
  %v278 = vadd.f32 %v277, %v205
  %v279 = vadd.f32 %v278, %v210
  %v280 = vadd.f32 %v279, %v215
  %v281 = vadd.f32 %v280, %v220
  %v282 = vadd.f32 %v281, %v225
  %v283 = vadd.f32 %v282, %v230
  %v284 = vadd.f32 %v283, %v235
  %v285 = vadd.f32 %v284, %v240
  %v286 = vadd.f32 %v285, %v245
  %v287 = vadd.f32 %v286, %v250
  %v288 = vadd.f32 %v287, %v255
  %v289 = vrot.slane %v288, 4
  %v290 = vadd.f32 %v288, %v289
  %v291 = vrot.slane %v290, 2
  %v292 = vadd.f32 %v290, %v291
  %v293 = vrot.slane %v292, 1
  %v294 = vadd.f32 %v292, %v293
  %v295 = vmul.f32 %v180, %v180
  %v296 = vmul.f32 %v185, %v185
  %v297 = vmul.f32 %v190, %v190
  %v298 = vmul.f32 %v195, %v195
  %v299 = vmul.f32 %v200, %v200
  %v300 = vmul.f32 %v205, %v205
  %v301 = vmul.f32 %v210, %v210
  %v302 = vmul.f32 %v215, %v215
  %v303 = vmul.f32 %v220, %v220
  %v304 = vmul.f32 %v225, %v225
  %v305 = vmul.f32 %v230, %v230
  %v306 = vmul.f32 %v235, %v235
  %v307 = vmul.f32 %v240, %v240
  %v308 = vmul.f32 %v245, %v245
  %v309 = vmul.f32 %v250, %v250
  %v310 = vmul.f32 %v255, %v255
  %v311 = vadd.f32 %v295, %v296
  %v312 = vadd.f32 %v311, %v297
  %v313 = vadd.f32 %v312, %v298
  %v314 = vadd.f32 %v313, %v299
  %v315 = vadd.f32 %v314, %v300
  %v316 = vadd.f32 %v315, %v301
  %v317 = vadd.f32 %v316, %v302
  %v318 = vadd.f32 %v317, %v303
  %v319 = vadd.f32 %v318, %v304
  %v320 = vadd.f32 %v319, %v305
  %v321 = vadd.f32 %v320, %v306
  %v322 = vadd.f32 %v321, %v307
  %v323 = vadd.f32 %v322, %v308
  %v324 = vadd.f32 %v323, %v309
  %v325 = vadd.f32 %v324, %v310
  %v326 = vrot.slane %v325, 4
  %v327 = vadd.f32 %v325, %v326
  %v328 = vrot.slane %v327, 2
  %v329 = vadd.f32 %v327, %v328
  %v330 = vrot.slane %v329, 1
  %v331 = vadd.f32 %v329, %v330
  %vm332 = vcmask 1040384
  %v333 = vsel %vm332, %v294, %v331
  %334 = vst [vmem:[%s5] sm:$0x3] %v333
  // Predicated region
  $region18: #{res_bottleneck.6} parent=0 // pred_check
    _
  $region19: #{res_bottleneck.6} parent=0 // pred_check_branch
    %336 = sbr.rel (0) target = $region21
  $region20: #{res_bottleneck.6} parent=0 // pred_region
    _
  $region21: #{res_bottleneck.6} parent=0 // pred_fallthru
    _
  // Predicated region
  $region22: #{res_bottleneck.6} parent=0 // pred_check
    _
  $region23: #{res_bottleneck.6} parent=0 // pred_check_branch
    %338 = sbr.rel (0) target = $region25
  $region24: #{res_bottleneck.6} parent=0 // pred_region
    _
  $region25: #{res_bottleneck.6} parent=0 // pred_fallthru
    _
  // Predicated region
  $region26: #{res_bottleneck.6} parent=0 // pred_check
    _
  $region27: #{res_bottleneck.6} parent=0 // pred_check_branch
    %340 = sbr.rel (0) target = $region29
  $region28: #{res_bottleneck.6} parent=0 // pred_region
    _
  $region29: #{res_bottleneck.6} parent=0 // pred_fallthru
    _
  // Predicated region
  $region30: #{res_bottleneck.6} parent=0 // pred_check
    _
  $region31: #{res_bottleneck.6} parent=0 // pred_check_branch
    %342 = sbr.rel (0) target = $region33
  $region32: #{res_bottleneck.6} parent=0 // pred_region
    _
  $region33: #{res_bottleneck.6} parent=0 // pred_fallthru
    _

// kernel: res_bottleneck.5
$region0: #{res_bottleneck.5}
  #allocation0 [shape = 'u32[]', space=smem, size = 0x4, offset = 0x4, fixed_abs, tag = 'smem constant byte address 0x4 - core index']
  #allocation1 [shape = 'u32[144,128]{1,0:T(1,128)}', space=vmem, size = 0x12000, scoped, tag = 'internal scratch']
  #allocation2 [shape = 'f32[2,10,10,128]{3,2,1,0:T(8,128)}', space=vmem, size = 0x28000, scoped, tag = 'scratch operand']
  %s0 = inlined_call_operand.vmem [shape: f32[2,8,8,128], index: 0, kind: input, shape index: {}]
  %s1 = inlined_call_operand.vmem [shape: f32[1,128], index: 1, kind: input, shape index: {}]
  %s2 = inlined_call_operand.vmem [shape: f32[1,128], index: 2, kind: input, shape index: {}]
  %s3 = inlined_call_operand.vmem [shape: f32[1152,128], index: 3, kind: input, shape index: {}]
  %s4 = inlined_call_operand.vmem [shape: f32[2,8,8,128], index: 4, kind: output, shape index: {0}]
  %s5 = inlined_call_operand.vmem [shape: f32[1,2,128], index: 5, kind: output, shape index: {1}]
  %6 = xla_tuple %s4, %s5
  %s7 = sld [smem:[#allocation0]]
  $region34: #{res_bottleneck.5} parent=0
    _
  %s9 = ssub.s32 1, %s7
  %s10 = scalar_select 0, %s9, %s7
  // Predicated region
  $region2: #{res_bottleneck.5} parent=0 // pred_check
    _
  $region3: #{res_bottleneck.5} parent=0 // pred_check_branch
    %12 = sbr.rel (0) target = $region5
  $region4: #{res_bottleneck.5} parent=0 // pred_region
    _
  $region5: #{res_bottleneck.5} parent=0 // pred_fallthru
    _
  // Predicated region
  $region6: #{res_bottleneck.5} parent=0 // pred_check
    _
  $region7: #{res_bottleneck.5} parent=0 // pred_check_branch
    %14 = sbr.rel (0) target = $region9
  $region8: #{res_bottleneck.5} parent=0 // pred_region
    _
  $region9: #{res_bottleneck.5} parent=0 // pred_fallthru
    _
  // Predicated region
  $region10: #{res_bottleneck.5} parent=0 // pred_check
    _
  $region11: #{res_bottleneck.5} parent=0 // pred_check_branch
    %16 = sbr.rel (0) target = $region13
  $region12: #{res_bottleneck.5} parent=0 // pred_region
    _
  $region13: #{res_bottleneck.5} parent=0 // pred_fallthru
    _
  // Predicated region
  $region14: #{res_bottleneck.5} parent=0 // pred_check
    _
  $region15: #{res_bottleneck.5} parent=0 // pred_check_branch
    %18 = sbr.rel (0) target = $region17
  $region16: #{res_bottleneck.5} parent=0 // pred_region
    _
  $region17: #{res_bottleneck.5} parent=0 // pred_fallthru
    _
  %v19 = vld [vmem:[%s0] sm:$0xff]
  %v20 = vld [vmem:[%s0 + $0x8] sm:$0xff]
  %v21 = vld [vmem:[%s0 + $0x10] sm:$0xff]
  %v22 = vld [vmem:[%s0 + $0x18] sm:$0xff]
  %v23 = vld [vmem:[%s0 + $0x20] sm:$0xff]
  %v24 = vld [vmem:[%s0 + $0x28] sm:$0xff]
  %v25 = vld [vmem:[%s0 + $0x30] sm:$0xff]
  %v26 = vld [vmem:[%s0 + $0x38] sm:$0xff]
  %v27 = vld [vmem:[%s0 + $0x40] sm:$0xff]
  %v28 = vld [vmem:[%s0 + $0x48] sm:$0xff]
  %v29 = vld [vmem:[%s0 + $0x50] sm:$0xff]
  %v30 = vld [vmem:[%s0 + $0x58] sm:$0xff]
  %v31 = vld [vmem:[%s0 + $0x60] sm:$0xff]
  %v32 = vld [vmem:[%s0 + $0x68] sm:$0xff]
  %v33 = vld [vmem:[%s0 + $0x70] sm:$0xff]
  %v34 = vld [vmem:[%s0 + $0x78] sm:$0xff]
  %v35 = vld [vmem:[%s1] sm:$0x1]
  %v37 = vlaneseq
  %v38 = vshrl.u32 %v37, 7
  %v39 = vsub.s32 0, %v38
  %v40 = vrot.slane %v35, %v39
  %v42 = vmul.f32 %v19, %v40
  %v43 = vmul.f32 %v20, %v40
  %v44 = vmul.f32 %v21, %v40
  %v45 = vmul.f32 %v22, %v40
  %v46 = vmul.f32 %v23, %v40
  %v47 = vmul.f32 %v24, %v40
  %v48 = vmul.f32 %v25, %v40
  %v49 = vmul.f32 %v26, %v40
  %v50 = vmul.f32 %v27, %v40
  %v51 = vmul.f32 %v28, %v40
  %v52 = vmul.f32 %v29, %v40
  %v53 = vmul.f32 %v30, %v40
  %v54 = vmul.f32 %v31, %v40
  %v55 = vmul.f32 %v32, %v40
  %v56 = vmul.f32 %v33, %v40
  %v57 = vmul.f32 %v34, %v40
  %v58 = vld [vmem:[%s2] sm:$0x1]
  %v60 = vlaneseq
  %v61 = vshrl.u32 %v60, 7
  %v62 = vsub.s32 0, %v61
  %v63 = vrot.slane %v58, %v62
  %v65 = vadd.f32 %v42, %v63
  %v66 = vadd.f32 %v43, %v63
  %v67 = vadd.f32 %v44, %v63
  %v68 = vadd.f32 %v45, %v63
  %v69 = vadd.f32 %v46, %v63
  %v70 = vadd.f32 %v47, %v63
  %v71 = vadd.f32 %v48, %v63
  %v72 = vadd.f32 %v49, %v63
  %v73 = vadd.f32 %v50, %v63
  %v74 = vadd.f32 %v51, %v63
  %v75 = vadd.f32 %v52, %v63
  %v76 = vadd.f32 %v53, %v63
  %v77 = vadd.f32 %v54, %v63
  %v78 = vadd.f32 %v55, %v63
  %v79 = vadd.f32 %v56, %v63
  %v80 = vadd.f32 %v57, %v63
  %v81 = vmax.f32 %v65, 0.0
  %v82 = vmax.f32 %v66, 0.0
  %v83 = vmax.f32 %v67, 0.0
  %v84 = vmax.f32 %v68, 0.0
  %v85 = vmax.f32 %v69, 0.0
  %v86 = vmax.f32 %v70, 0.0
  %v87 = vmax.f32 %v71, 0.0
  %v88 = vmax.f32 %v72, 0.0
  %v89 = vmax.f32 %v73, 0.0
  %v90 = vmax.f32 %v74, 0.0
  %v91 = vmax.f32 %v75, 0.0
  %v92 = vmax.f32 %v76, 0.0
  %v93 = vmax.f32 %v77, 0.0
  %v94 = vmax.f32 %v78, 0.0
  %v95 = vmax.f32 %v79, 0.0
  %v96 = vmax.f32 %v80, 0.0
  %97 = vst [vmem:[#allocation2] sm:$0xff] 0.0
  %98 = vst [vmem:[#allocation2 + $0x8] sm:$0x3] 0.0
  %99 = vst [vmem:[#allocation2 + $0xa0] sm:$0xff] 0.0
  %100 = vst [vmem:[#allocation2 + $0xa8] sm:$0x3] 0.0
  %s101 = scalar_lea.vmem [#allocation2], 144
  %102 = vst [vmem:[%s101] sm:$0xff] 0.0
  %103 = vst [vmem:[%s101 + $0x8] sm:$0x3] 0.0
  %104 = vst [vmem:[%s101 + $0xa0] sm:$0xff] 0.0
  %105 = vst [vmem:[%s101 + $0xa8] sm:$0x3] 0.0
  %106 = vst [vmem:[#allocation2] sm:$0x1] 0.0
  %107 = vst [vmem:[#allocation2 + $0x10] sm:$0x1] 0.0
  %108 = vst [vmem:[#allocation2 + $0x20] sm:$0x1] 0.0
  %109 = vst [vmem:[#allocation2 + $0x30] sm:$0x1] 0.0
  %110 = vst [vmem:[#allocation2 + $0x40] sm:$0x1] 0.0
  %111 = vst [vmem:[#allocation2 + $0x50] sm:$0x1] 0.0
  %112 = vst [vmem:[#allocation2 + $0x60] sm:$0x1] 0.0
  %113 = vst [vmem:[#allocation2 + $0x70] sm:$0x1] 0.0
  %114 = vst [vmem:[#allocation2 + $0x80] sm:$0x1] 0.0
  %115 = vst [vmem:[#allocation2 + $0x90] sm:$0x1] 0.0
  %116 = vst [vmem:[#allocation2 + $0xa0] sm:$0x1] 0.0
  %117 = vst [vmem:[#allocation2 + $0xb0] sm:$0x1] 0.0
  %118 = vst [vmem:[#allocation2 + $0xc0] sm:$0x1] 0.0
  %119 = vst [vmem:[#allocation2 + $0xd0] sm:$0x1] 0.0
  %120 = vst [vmem:[#allocation2 + $0xe0] sm:$0x1] 0.0
  %121 = vst [vmem:[#allocation2 + $0xf0] sm:$0x1] 0.0
  %122 = vst [vmem:[#allocation2 + $0x100] sm:$0x1] 0.0
  %123 = vst [vmem:[#allocation2 + $0x110] sm:$0x1] 0.0
  %124 = vst [vmem:[#allocation2 + $0x120] sm:$0x1] 0.0
  %125 = vst [vmem:[#allocation2 + $0x130] sm:$0x1] 0.0
  %126 = vst [vmem:[#allocation2 + $0x9] sm:$0x1] 0.0
  %127 = vst [vmem:[#allocation2 + $0x19] sm:$0x1] 0.0
  %128 = vst [vmem:[#allocation2 + $0x29] sm:$0x1] 0.0
  %129 = vst [vmem:[#allocation2 + $0x39] sm:$0x1] 0.0
  %130 = vst [vmem:[#allocation2 + $0x49] sm:$0x1] 0.0
  %131 = vst [vmem:[#allocation2 + $0x59] sm:$0x1] 0.0
  %132 = vst [vmem:[#allocation2 + $0x69] sm:$0x1] 0.0
  %133 = vst [vmem:[#allocation2 + $0x79] sm:$0x1] 0.0
  %134 = vst [vmem:[#allocation2 + $0x89] sm:$0x1] 0.0
  %135 = vst [vmem:[#allocation2 + $0x99] sm:$0x1] 0.0
  %136 = vst [vmem:[#allocation2 + $0xa9] sm:$0x1] 0.0
  %137 = vst [vmem:[#allocation2 + $0xb9] sm:$0x1] 0.0
  %138 = vst [vmem:[#allocation2 + $0xc9] sm:$0x1] 0.0
  %139 = vst [vmem:[#allocation2 + $0xd9] sm:$0x1] 0.0
  %140 = vst [vmem:[#allocation2 + $0xe9] sm:$0x1] 0.0
  %141 = vst [vmem:[#allocation2 + $0xf9] sm:$0x1] 0.0
  %142 = vst [vmem:[#allocation2 + $0x109] sm:$0x1] 0.0
  %143 = vst [vmem:[#allocation2 + $0x119] sm:$0x1] 0.0
  %144 = vst [vmem:[#allocation2 + $0x129] sm:$0x1] 0.0
  %145 = vst [vmem:[#allocation2 + $0x139] sm:$0x1] 0.0
  %s146 = scalar_lea.vmem [#allocation2], 16
  %147 = vst [vmem:[%s146 + $0x1] sm:$0xff] %v81
  %148 = vst [vmem:[%s146 + $0x11] sm:$0xff] %v82
  %149 = vst [vmem:[%s146 + $0x21] sm:$0xff] %v83
  %150 = vst [vmem:[%s146 + $0x31] sm:$0xff] %v84
  %151 = vst [vmem:[%s146 + $0x41] sm:$0xff] %v85
  %152 = vst [vmem:[%s146 + $0x51] sm:$0xff] %v86
  %153 = vst [vmem:[%s146 + $0x61] sm:$0xff] %v87
  %154 = vst [vmem:[%s146 + $0x71] sm:$0xff] %v88
  %155 = vst [vmem:[%s146 + $0xa1] sm:$0xff] %v89
  %156 = vst [vmem:[%s146 + $0xb1] sm:$0xff] %v90
  %157 = vst [vmem:[%s146 + $0xc1] sm:$0xff] %v91
  %158 = vst [vmem:[%s146 + $0xd1] sm:$0xff] %v92
  %159 = vst [vmem:[%s146 + $0xe1] sm:$0xff] %v93
  %160 = vst [vmem:[%s146 + $0xf1] sm:$0xff] %v94
  %161 = vst [vmem:[%s146 + $0x101] sm:$0xff] %v95
  %162 = vst [vmem:[%s146 + $0x111] sm:$0xff] %v96
  %v163 = vld [vmem:[#allocation2] sm:$0xff]
  %v164 = vld [vmem:[#allocation2 + $0x10] sm:$0xff]
  %v165 = vld [vmem:[#allocation2 + $0x20] sm:$0xff]
  %v166 = vld [vmem:[#allocation2 + $0x30] sm:$0xff]
  %v167 = vld [vmem:[#allocation2 + $0x40] sm:$0xff]
  %v168 = vld [vmem:[#allocation2 + $0x50] sm:$0xff]
  %v169 = vld [vmem:[#allocation2 + $0x60] sm:$0xff]
  %v170 = vld [vmem:[#allocation2 + $0x70] sm:$0xff]
  %v171 = vld [vmem:[#allocation2 + $0xa0] sm:$0xff]
  %v172 = vld [vmem:[#allocation2 + $0xb0] sm:$0xff]
  %v173 = vld [vmem:[#allocation2 + $0xc0] sm:$0xff]
  %v174 = vld [vmem:[#allocation2 + $0xd0] sm:$0xff]
  %v175 = vld [vmem:[#allocation2 + $0xe0] sm:$0xff]
  %v176 = vld [vmem:[#allocation2 + $0xf0] sm:$0xff]
  %v177 = vld [vmem:[#allocation2 + $0x100] sm:$0xff]
  %v178 = vld [vmem:[#allocation2 + $0x110] sm:$0xff]
  %v179 = vld [vmem:[#allocation2 + $0x1] sm:$0xff]
  %v180 = vld [vmem:[#allocation2 + $0x11] sm:$0xff]
  %v181 = vld [vmem:[#allocation2 + $0x21] sm:$0xff]
  %v182 = vld [vmem:[#allocation2 + $0x31] sm:$0xff]
  %v183 = vld [vmem:[#allocation2 + $0x41] sm:$0xff]
  %v184 = vld [vmem:[#allocation2 + $0x51] sm:$0xff]
  %v185 = vld [vmem:[#allocation2 + $0x61] sm:$0xff]
  %v186 = vld [vmem:[#allocation2 + $0x71] sm:$0xff]
  %v187 = vld [vmem:[#allocation2 + $0xa1] sm:$0xff]
  %v188 = vld [vmem:[#allocation2 + $0xb1] sm:$0xff]
  %v189 = vld [vmem:[#allocation2 + $0xc1] sm:$0xff]
  %v190 = vld [vmem:[#allocation2 + $0xd1] sm:$0xff]
  %v191 = vld [vmem:[#allocation2 + $0xe1] sm:$0xff]
  %v192 = vld [vmem:[#allocation2 + $0xf1] sm:$0xff]
  %v193 = vld [vmem:[#allocation2 + $0x101] sm:$0xff]
  %v194 = vld [vmem:[#allocation2 + $0x111] sm:$0xff]
  %v195 = vld [vmem:[#allocation2 + $0x2] sm:$0xff]
  %v196 = vld [vmem:[#allocation2 + $0x12] sm:$0xff]
  %v197 = vld [vmem:[#allocation2 + $0x22] sm:$0xff]
  %v198 = vld [vmem:[#allocation2 + $0x32] sm:$0xff]
  %v199 = vld [vmem:[#allocation2 + $0x42] sm:$0xff]
  %v200 = vld [vmem:[#allocation2 + $0x52] sm:$0xff]
  %v201 = vld [vmem:[#allocation2 + $0x62] sm:$0xff]
  %v202 = vld [vmem:[#allocation2 + $0x72] sm:$0xff]
  %v203 = vld [vmem:[#allocation2 + $0xa2] sm:$0xff]
  %v204 = vld [vmem:[#allocation2 + $0xb2] sm:$0xff]
  %v205 = vld [vmem:[#allocation2 + $0xc2] sm:$0xff]
  %v206 = vld [vmem:[#allocation2 + $0xd2] sm:$0xff]
  %v207 = vld [vmem:[#allocation2 + $0xe2] sm:$0xff]
  %v208 = vld [vmem:[#allocation2 + $0xf2] sm:$0xff]
  %v209 = vld [vmem:[#allocation2 + $0x102] sm:$0xff]
  %v210 = vld [vmem:[#allocation2 + $0x112] sm:$0xff]
  %v211 = vld [vmem:[%s146] sm:$0xff]
  %v212 = vld [vmem:[%s146 + $0x10] sm:$0xff]
  %v213 = vld [vmem:[%s146 + $0x20] sm:$0xff]
  %v214 = vld [vmem:[%s146 + $0x30] sm:$0xff]
  %v215 = vld [vmem:[%s146 + $0x40] sm:$0xff]
  %v216 = vld [vmem:[%s146 + $0x50] sm:$0xff]
  %v217 = vld [vmem:[%s146 + $0x60] sm:$0xff]
  %v218 = vld [vmem:[%s146 + $0x70] sm:$0xff]
  %v219 = vld [vmem:[%s146 + $0xa0] sm:$0xff]
  %v220 = vld [vmem:[%s146 + $0xb0] sm:$0xff]
  %v221 = vld [vmem:[%s146 + $0xc0] sm:$0xff]
  %v222 = vld [vmem:[%s146 + $0xd0] sm:$0xff]
  %v223 = vld [vmem:[%s146 + $0xe0] sm:$0xff]
  %v224 = vld [vmem:[%s146 + $0xf0] sm:$0xff]
  %v225 = vld [vmem:[%s146 + $0x100] sm:$0xff]
  %v226 = vld [vmem:[%s146 + $0x110] sm:$0xff]
  %v227 = vld [vmem:[%s146 + $0x1] sm:$0xff]
  %v228 = vld [vmem:[%s146 + $0x11] sm:$0xff]
  %v229 = vld [vmem:[%s146 + $0x21] sm:$0xff]
  %v230 = vld [vmem:[%s146 + $0x31] sm:$0xff]
  %v231 = vld [vmem:[%s146 + $0x41] sm:$0xff]
  %v232 = vld [vmem:[%s146 + $0x51] sm:$0xff]
  %v233 = vld [vmem:[%s146 + $0x61] sm:$0xff]
  %v234 = vld [vmem:[%s146 + $0x71] sm:$0xff]
  %v235 = vld [vmem:[%s146 + $0xa1] sm:$0xff]
  %v236 = vld [vmem:[%s146 + $0xb1] sm:$0xff]
  %v237 = vld [vmem:[%s146 + $0xc1] sm:$0xff]
  %v238 = vld [vmem:[%s146 + $0xd1] sm:$0xff]
  %v239 = vld [vmem:[%s146 + $0xe1] sm:$0xff]
  %v240 = vld [vmem:[%s146 + $0xf1] sm:$0xff]
  %v241 = vld [vmem:[%s146 + $0x101] sm:$0xff]
  %v242 = vld [vmem:[%s146 + $0x111] sm:$0xff]
  %v243 = vld [vmem:[%s146 + $0x2] sm:$0xff]
  %v244 = vld [vmem:[%s146 + $0x12] sm:$0xff]
  %v245 = vld [vmem:[%s146 + $0x22] sm:$0xff]
  %v246 = vld [vmem:[%s146 + $0x32] sm:$0xff]
  %v247 = vld [vmem:[%s146 + $0x42] sm:$0xff]
  %v248 = vld [vmem:[%s146 + $0x52] sm:$0xff]
  %v249 = vld [vmem:[%s146 + $0x62] sm:$0xff]
  %v250 = vld [vmem:[%s146 + $0x72] sm:$0xff]
  %v251 = vld [vmem:[%s146 + $0xa2] sm:$0xff]
  %v252 = vld [vmem:[%s146 + $0xb2] sm:$0xff]
  %v253 = vld [vmem:[%s146 + $0xc2] sm:$0xff]
  %v254 = vld [vmem:[%s146 + $0xd2] sm:$0xff]
  %v255 = vld [vmem:[%s146 + $0xe2] sm:$0xff]
  %v256 = vld [vmem:[%s146 + $0xf2] sm:$0xff]
  %v257 = vld [vmem:[%s146 + $0x102] sm:$0xff]
  %v258 = vld [vmem:[%s146 + $0x112] sm:$0xff]
  %s259 = scalar_lea.vmem [#allocation2], 32
  %v260 = vld [vmem:[%s259] sm:$0xff]
  %v261 = vld [vmem:[%s259 + $0x10] sm:$0xff]
  %v262 = vld [vmem:[%s259 + $0x20] sm:$0xff]
  %v263 = vld [vmem:[%s259 + $0x30] sm:$0xff]
  %v264 = vld [vmem:[%s259 + $0x40] sm:$0xff]
  %v265 = vld [vmem:[%s259 + $0x50] sm:$0xff]
  %v266 = vld [vmem:[%s259 + $0x60] sm:$0xff]
  %v267 = vld [vmem:[%s259 + $0x70] sm:$0xff]
  %v268 = vld [vmem:[%s259 + $0xa0] sm:$0xff]
  %v269 = vld [vmem:[%s259 + $0xb0] sm:$0xff]
  %v270 = vld [vmem:[%s259 + $0xc0] sm:$0xff]
  %v271 = vld [vmem:[%s259 + $0xd0] sm:$0xff]
  %v272 = vld [vmem:[%s259 + $0xe0] sm:$0xff]
  %v273 = vld [vmem:[%s259 + $0xf0] sm:$0xff]
  %v274 = vld [vmem:[%s259 + $0x100] sm:$0xff]
  %v275 = vld [vmem:[%s259 + $0x110] sm:$0xff]
  %v276 = vld [vmem:[%s259 + $0x1] sm:$0xff]
  %v277 = vld [vmem:[%s259 + $0x11] sm:$0xff]
  %v278 = vld [vmem:[%s259 + $0x21] sm:$0xff]
  %v279 = vld [vmem:[%s259 + $0x31] sm:$0xff]
  %v280 = vld [vmem:[%s259 + $0x41] sm:$0xff]
  %v281 = vld [vmem:[%s259 + $0x51] sm:$0xff]
  %v282 = vld [vmem:[%s259 + $0x61] sm:$0xff]
  %v283 = vld [vmem:[%s259 + $0x71] sm:$0xff]
  %v284 = vld [vmem:[%s259 + $0xa1] sm:$0xff]
  %v285 = vld [vmem:[%s259 + $0xb1] sm:$0xff]
  %v286 = vld [vmem:[%s259 + $0xc1] sm:$0xff]
  %v287 = vld [vmem:[%s259 + $0xd1] sm:$0xff]
  %v288 = vld [vmem:[%s259 + $0xe1] sm:$0xff]
  %v289 = vld [vmem:[%s259 + $0xf1] sm:$0xff]
  %v290 = vld [vmem:[%s259 + $0x101] sm:$0xff]
  %v291 = vld [vmem:[%s259 + $0x111] sm:$0xff]
  %v292 = vld [vmem:[%s259 + $0x2] sm:$0xff]
  %v293 = vld [vmem:[%s259 + $0x12] sm:$0xff]
  %v294 = vld [vmem:[%s259 + $0x22] sm:$0xff]
  %v295 = vld [vmem:[%s259 + $0x32] sm:$0xff]
  %v296 = vld [vmem:[%s259 + $0x42] sm:$0xff]
  %v297 = vld [vmem:[%s259 + $0x52] sm:$0xff]
  %v298 = vld [vmem:[%s259 + $0x62] sm:$0xff]
  %v299 = vld [vmem:[%s259 + $0x72] sm:$0xff]
  %v300 = vld [vmem:[%s259 + $0xa2] sm:$0xff]
  %v301 = vld [vmem:[%s259 + $0xb2] sm:$0xff]
  %v302 = vld [vmem:[%s259 + $0xc2] sm:$0xff]
  %v303 = vld [vmem:[%s259 + $0xd2] sm:$0xff]
  %v304 = vld [vmem:[%s259 + $0xe2] sm:$0xff]
  %v305 = vld [vmem:[%s259 + $0xf2] sm:$0xff]
  %v306 = vld [vmem:[%s259 + $0x102] sm:$0xff]
  %v307 = vld [vmem:[%s259 + $0x112] sm:$0xff]
  %v308 = vld [vmem:[%s3] sm:$0xff]
  %v309 = vld [vmem:[%s3 + $0x8] sm:$0xff]
  %v310 = vld [vmem:[%s3 + $0x10] sm:$0xff]
  %v311 = vld [vmem:[%s3 + $0x18] sm:$0xff]
  %v312 = vld [vmem:[%s3 + $0x20] sm:$0xff]
  %v313 = vld [vmem:[%s3 + $0x28] sm:$0xff]
  %v314 = vld [vmem:[%s3 + $0x30] sm:$0xff]
  %v315 = vld [vmem:[%s3 + $0x38] sm:$0xff]
  %v316 = vld [vmem:[%s3 + $0x40] sm:$0xff]
  %v317 = vld [vmem:[%s3 + $0x48] sm:$0xff]
  %v318 = vld [vmem:[%s3 + $0x50] sm:$0xff]
  %v319 = vld [vmem:[%s3 + $0x58] sm:$0xff]
  %v320 = vld [vmem:[%s3 + $0x60] sm:$0xff]
  %v321 = vld [vmem:[%s3 + $0x68] sm:$0xff]
  %v322 = vld [vmem:[%s3 + $0x70] sm:$0xff]
  %v323 = vld [vmem:[%s3 + $0x78] sm:$0xff]
  %v324 = vld [vmem:[%s3 + $0x80] sm:$0xff]
  %v325 = vld [vmem:[%s3 + $0x88] sm:$0xff]
  %v326 = vld [vmem:[%s3 + $0x90] sm:$0xff]
  %v327 = vld [vmem:[%s3 + $0x98] sm:$0xff]
  %v328 = vld [vmem:[%s3 + $0xa0] sm:$0xff]
  %v329 = vld [vmem:[%s3 + $0xa8] sm:$0xff]
  %v330 = vld [vmem:[%s3 + $0xb0] sm:$0xff]
  %v331 = vld [vmem:[%s3 + $0xb8] sm:$0xff]
  %v332 = vld [vmem:[%s3 + $0xc0] sm:$0xff]
  %v333 = vld [vmem:[%s3 + $0xc8] sm:$0xff]
  %v334 = vld [vmem:[%s3 + $0xd0] sm:$0xff]
  %v335 = vld [vmem:[%s3 + $0xd8] sm:$0xff]
  %v336 = vld [vmem:[%s3 + $0xe0] sm:$0xff]
  %v337 = vld [vmem:[%s3 + $0xe8] sm:$0xff]
  %v338 = vld [vmem:[%s3 + $0xf0] sm:$0xff]
  %v339 = vld [vmem:[%s3 + $0xf8] sm:$0xff]
  %v340 = vld [vmem:[%s3 + $0x100] sm:$0xff]
  %v341 = vld [vmem:[%s3 + $0x108] sm:$0xff]
  %v342 = vld [vmem:[%s3 + $0x110] sm:$0xff]
  %v343 = vld [vmem:[%s3 + $0x118] sm:$0xff]
  %v344 = vld [vmem:[%s3 + $0x120] sm:$0xff]
  %v345 = vld [vmem:[%s3 + $0x128] sm:$0xff]
  %v346 = vld [vmem:[%s3 + $0x130] sm:$0xff]
  %v347 = vld [vmem:[%s3 + $0x138] sm:$0xff]
  %v348 = vld [vmem:[%s3 + $0x140] sm:$0xff]
  %v349 = vld [vmem:[%s3 + $0x148] sm:$0xff]
  %v350 = vld [vmem:[%s3 + $0x150] sm:$0xff]
  %v351 = vld [vmem:[%s3 + $0x158] sm:$0xff]
  %v352 = vld [vmem:[%s3 + $0x160] sm:$0xff]
  %v353 = vld [vmem:[%s3 + $0x168] sm:$0xff]
  %v354 = vld [vmem:[%s3 + $0x170] sm:$0xff]
  %v355 = vld [vmem:[%s3 + $0x178] sm:$0xff]
  %v356 = vld [vmem:[%s3 + $0x180] sm:$0xff]
  %v357 = vld [vmem:[%s3 + $0x188] sm:$0xff]
  %v358 = vld [vmem:[%s3 + $0x190] sm:$0xff]
  %v359 = vld [vmem:[%s3 + $0x198] sm:$0xff]
  %v360 = vld [vmem:[%s3 + $0x1a0] sm:$0xff]
  %v361 = vld [vmem:[%s3 + $0x1a8] sm:$0xff]
  %v362 = vld [vmem:[%s3 + $0x1b0] sm:$0xff]
  %v363 = vld [vmem:[%s3 + $0x1b8] sm:$0xff]
  %v364 = vld [vmem:[%s3 + $0x1c0] sm:$0xff]
  %v365 = vld [vmem:[%s3 + $0x1c8] sm:$0xff]
  %v366 = vld [vmem:[%s3 + $0x1d0] sm:$0xff]
  %v367 = vld [vmem:[%s3 + $0x1d8] sm:$0xff]
  %v368 = vld [vmem:[%s3 + $0x1e0] sm:$0xff]
  %v369 = vld [vmem:[%s3 + $0x1e8] sm:$0xff]
  %v370 = vld [vmem:[%s3 + $0x1f0] sm:$0xff]
  %v371 = vld [vmem:[%s3 + $0x1f8] sm:$0xff]
  %v372 = vld [vmem:[%s3 + $0x200] sm:$0xff]
  %v373 = vld [vmem:[%s3 + $0x208] sm:$0xff]
  %v374 = vld [vmem:[%s3 + $0x210] sm:$0xff]
  %v375 = vld [vmem:[%s3 + $0x218] sm:$0xff]
  %v376 = vld [vmem:[%s3 + $0x220] sm:$0xff]
  %v377 = vld [vmem:[%s3 + $0x228] sm:$0xff]
  %v378 = vld [vmem:[%s3 + $0x230] sm:$0xff]
  %v379 = vld [vmem:[%s3 + $0x238] sm:$0xff]
  %v380 = vld [vmem:[%s3 + $0x240] sm:$0xff]
  %v381 = vld [vmem:[%s3 + $0x248] sm:$0xff]
  %v382 = vld [vmem:[%s3 + $0x250] sm:$0xff]
  %v383 = vld [vmem:[%s3 + $0x258] sm:$0xff]
  %v384 = vld [vmem:[%s3 + $0x260] sm:$0xff]
  %v385 = vld [vmem:[%s3 + $0x268] sm:$0xff]
  %v386 = vld [vmem:[%s3 + $0x270] sm:$0xff]
  %v387 = vld [vmem:[%s3 + $0x278] sm:$0xff]
  %v388 = vld [vmem:[%s3 + $0x280] sm:$0xff]
  %v389 = vld [vmem:[%s3 + $0x288] sm:$0xff]
  %v390 = vld [vmem:[%s3 + $0x290] sm:$0xff]
  %v391 = vld [vmem:[%s3 + $0x298] sm:$0xff]
  %v392 = vld [vmem:[%s3 + $0x2a0] sm:$0xff]
  %v393 = vld [vmem:[%s3 + $0x2a8] sm:$0xff]
  %v394 = vld [vmem:[%s3 + $0x2b0] sm:$0xff]
  %v395 = vld [vmem:[%s3 + $0x2b8] sm:$0xff]
  %v396 = vld [vmem:[%s3 + $0x2c0] sm:$0xff]
  %v397 = vld [vmem:[%s3 + $0x2c8] sm:$0xff]
  %v398 = vld [vmem:[%s3 + $0x2d0] sm:$0xff]
  %v399 = vld [vmem:[%s3 + $0x2d8] sm:$0xff]
  %v400 = vld [vmem:[%s3 + $0x2e0] sm:$0xff]
  %v401 = vld [vmem:[%s3 + $0x2e8] sm:$0xff]
  %v402 = vld [vmem:[%s3 + $0x2f0] sm:$0xff]
  %v403 = vld [vmem:[%s3 + $0x2f8] sm:$0xff]
  %v404 = vld [vmem:[%s3 + $0x300] sm:$0xff]
  %v405 = vld [vmem:[%s3 + $0x308] sm:$0xff]
  %v406 = vld [vmem:[%s3 + $0x310] sm:$0xff]
  %v407 = vld [vmem:[%s3 + $0x318] sm:$0xff]
  %v408 = vld [vmem:[%s3 + $0x320] sm:$0xff]
  %v409 = vld [vmem:[%s3 + $0x328] sm:$0xff]
  %v410 = vld [vmem:[%s3 + $0x330] sm:$0xff]
  %v411 = vld [vmem:[%s3 + $0x338] sm:$0xff]
  %v412 = vld [vmem:[%s3 + $0x340] sm:$0xff]
  %v413 = vld [vmem:[%s3 + $0x348] sm:$0xff]
  %v414 = vld [vmem:[%s3 + $0x350] sm:$0xff]
  %v415 = vld [vmem:[%s3 + $0x358] sm:$0xff]
  %v416 = vld [vmem:[%s3 + $0x360] sm:$0xff]
  %v417 = vld [vmem:[%s3 + $0x368] sm:$0xff]
  %v418 = vld [vmem:[%s3 + $0x370] sm:$0xff]
  %v419 = vld [vmem:[%s3 + $0x378] sm:$0xff]
  %v420 = vld [vmem:[%s3 + $0x380] sm:$0xff]
  %v421 = vld [vmem:[%s3 + $0x388] sm:$0xff]
  %v422 = vld [vmem:[%s3 + $0x390] sm:$0xff]
  %v423 = vld [vmem:[%s3 + $0x398] sm:$0xff]
  %v424 = vld [vmem:[%s3 + $0x3a0] sm:$0xff]
  %v425 = vld [vmem:[%s3 + $0x3a8] sm:$0xff]
  %v426 = vld [vmem:[%s3 + $0x3b0] sm:$0xff]
  %v427 = vld [vmem:[%s3 + $0x3b8] sm:$0xff]
  %v428 = vld [vmem:[%s3 + $0x3c0] sm:$0xff]
  %v429 = vld [vmem:[%s3 + $0x3c8] sm:$0xff]
  %v430 = vld [vmem:[%s3 + $0x3d0] sm:$0xff]
  %v431 = vld [vmem:[%s3 + $0x3d8] sm:$0xff]
  %v432 = vld [vmem:[%s3 + $0x3e0] sm:$0xff]
  %v433 = vld [vmem:[%s3 + $0x3e8] sm:$0xff]
  %v434 = vld [vmem:[%s3 + $0x3f0] sm:$0xff]
  %v435 = vld [vmem:[%s3 + $0x3f8] sm:$0xff]
  %v436 = vld [vmem:[%s3 + $0x400] sm:$0xff]
  %v437 = vld [vmem:[%s3 + $0x408] sm:$0xff]
  %v438 = vld [vmem:[%s3 + $0x410] sm:$0xff]
  %v439 = vld [vmem:[%s3 + $0x418] sm:$0xff]
  %v440 = vld [vmem:[%s3 + $0x420] sm:$0xff]
  %v441 = vld [vmem:[%s3 + $0x428] sm:$0xff]
  %v442 = vld [vmem:[%s3 + $0x430] sm:$0xff]
  %v443 = vld [vmem:[%s3 + $0x438] sm:$0xff]
  %v444 = vld [vmem:[%s3 + $0x440] sm:$0xff]
  %v445 = vld [vmem:[%s3 + $0x448] sm:$0xff]
  %v446 = vld [vmem:[%s3 + $0x450] sm:$0xff]
  %v447 = vld [vmem:[%s3 + $0x458] sm:$0xff]
  %v448 = vld [vmem:[%s3 + $0x460] sm:$0xff]
  %v449 = vld [vmem:[%s3 + $0x468] sm:$0xff]
  %v450 = vld [vmem:[%s3 + $0x470] sm:$0xff]
  %v451 = vld [vmem:[%s3 + $0x478] sm:$0xff]
  %452 = vmatprep.subr.mxu0 0.0
  %453 = vmatpush1.msra.mxu0 %v323
  %454 = vmatprep.subr.mxu0 0.0
  %455 = vmatpush1.msra.mxu0 %v322
  %456 = vmatprep.subr.mxu0 0.0
  %457 = vmatpush1.msra.mxu0 %v321
  %458 = vmatprep.subr.mxu0 0.0
  %459 = vmatpush1.msra.mxu0 %v320
  %460 = vmatprep.subr.mxu0 0.0
  %461 = vmatpush1.msra.mxu0 %v319
  %462 = vmatprep.subr.mxu0 0.0
  %463 = vmatpush1.msra.mxu0 %v318
  %464 = vmatprep.subr.mxu0 0.0
  %465 = vmatpush1.msra.mxu0 %v317
  %466 = vmatprep.subr.mxu0 0.0
  %467 = vmatpush1.msra.mxu0 %v316
  %468 = vmatprep.subr.mxu0 0.0
  %469 = vmatpush1.msra.mxu0 %v315
  %470 = vmatprep.subr.mxu0 0.0
  %471 = vmatpush1.msra.mxu0 %v314
  %472 = vmatprep.subr.mxu0 0.0
  %473 = vmatpush1.msra.mxu0 %v313
  %474 = vmatprep.subr.mxu0 0.0
  %475 = vmatpush1.msra.mxu0 %v312
  %476 = vmatprep.subr.mxu0 0.0
  %477 = vmatpush1.msra.mxu0 %v311
  %478 = vmatprep.subr.mxu0 0.0
  %479 = vmatpush1.msra.mxu0 %v310
  %480 = vmatprep.subr.mxu0 0.0
  %481 = vmatpush1.msra.mxu0 %v309
  %482 = vmatprep.subr.mxu0 0.0
  %483 = vmatpush1.msra.mxu0 %v308
  %484 = vmatprep.subr.mxu0 0.0
  %485 = vmatpush2.msra.mxu0 %v339
  %486 = vmatprep.subr.mxu0 0.0
  %487 = vmatpush2.msra.mxu0 %v338
  %488 = vmatprep.subr.mxu0 0.0
  %489 = vmatpush2.msra.mxu0 %v337
  %490 = vmatprep.subr.mxu0 0.0
  %491 = vmatpush2.msra.mxu0 %v336
  %492 = vmatprep.subr.mxu0 0.0
  %493 = vmatpush2.msra.mxu0 %v335
  %494 = vmatprep.subr.mxu0 0.0
  %495 = vmatpush2.msra.mxu0 %v334
  %496 = vmatprep.subr.mxu0 0.0
  %497 = vmatpush2.msra.mxu0 %v333
  %498 = vmatprep.subr.mxu0 0.0
  %499 = vmatpush2.msra.mxu0 %v332
  %500 = vmatprep.subr.mxu0 0.0
  %501 = vmatpush2.msra.mxu0 %v331
  %502 = vmatprep.subr.mxu0 0.0
  %503 = vmatpush2.msra.mxu0 %v330
  %504 = vmatprep.subr.mxu0 0.0
  %505 = vmatpush2.msra.mxu0 %v329
  %506 = vmatprep.subr.mxu0 0.0
  %507 = vmatpush2.msra.mxu0 %v328
  %508 = vmatprep.subr.mxu0 0.0
  %509 = vmatpush2.msra.mxu0 %v327
  %510 = vmatprep.subr.mxu0 0.0
  %511 = vmatpush2.msra.mxu0 %v326
  %512 = vmatprep.subr.mxu0 0.0
  %513 = vmatpush2.msra.mxu0 %v325
  %514 = vmatprep.subr.mxu0 0.0
  %515 = vmatpush2.msra.mxu0 %v324
  %516 = vmatprep.mubr.f32.mxu0 %v179
  %517 = vmatmul.mubr.f32.gmra.mxu0 %v163
  %v518 = vpop.f32.mrf.mxu0
  %v519 = vadd.f32 0.0, %v518
  %v520 = vpop.f32.mrf.mxu0
  %521 = vmatprep.mubr.f32.mxu0 %v180
  %522 = vmatmul.mubr.f32.gmra.mxu0 %v164
  %v523 = vpop.f32.mrf.mxu0
  %v524 = vadd.f32 0.0, %v523
  %v525 = vpop.f32.mrf.mxu0
  %526 = vmatprep.mubr.f32.mxu0 %v181
  %527 = vmatmul.mubr.f32.gmra.mxu0 %v165
  %v528 = vpop.f32.mrf.mxu0
  %v529 = vadd.f32 0.0, %v528
  %v530 = vpop.f32.mrf.mxu0
  %531 = vmatprep.mubr.f32.mxu0 %v182
  %532 = vmatmul.mubr.f32.gmra.mxu0 %v166
  %v533 = vpop.f32.mrf.mxu0
  %v534 = vadd.f32 0.0, %v533
  %v535 = vpop.f32.mrf.mxu0
  %536 = vmatprep.mubr.f32.mxu0 %v183
  %537 = vmatmul.mubr.f32.gmra.mxu0 %v167
  %v538 = vpop.f32.mrf.mxu0
  %v539 = vadd.f32 0.0, %v538
  %v540 = vpop.f32.mrf.mxu0
  %541 = vmatprep.mubr.f32.mxu0 %v184
  %542 = vmatmul.mubr.f32.gmra.mxu0 %v168
  %v543 = vpop.f32.mrf.mxu0
  %v544 = vadd.f32 0.0, %v543
  %v545 = vpop.f32.mrf.mxu0
  %546 = vmatprep.mubr.f32.mxu0 %v185
  %547 = vmatmul.mubr.f32.gmra.mxu0 %v169
  %v548 = vpop.f32.mrf.mxu0
  %v549 = vadd.f32 0.0, %v548
  %v550 = vpop.f32.mrf.mxu0
  %551 = vmatprep.mubr.f32.mxu0 %v186
  %552 = vmatmul.mubr.f32.gmra.mxu0 %v170
  %v553 = vpop.f32.mrf.mxu0
  %v554 = vadd.f32 0.0, %v553
  %v555 = vpop.f32.mrf.mxu0
  %556 = vmatprep.mubr.f32.mxu0 %v187
  %557 = vmatmul.mubr.f32.gmra.mxu0 %v171
  %v558 = vpop.f32.mrf.mxu0
  %v559 = vadd.f32 0.0, %v558
  %v560 = vpop.f32.mrf.mxu0
  %561 = vmatprep.mubr.f32.mxu0 %v188
  %562 = vmatmul.mubr.f32.gmra.mxu0 %v172
  %v563 = vpop.f32.mrf.mxu0
  %v564 = vadd.f32 0.0, %v563
  %v565 = vpop.f32.mrf.mxu0
  %566 = vmatprep.mubr.f32.mxu0 %v189
  %567 = vmatmul.mubr.f32.gmra.mxu0 %v173
  %v568 = vpop.f32.mrf.mxu0
  %v569 = vadd.f32 0.0, %v568
  %v570 = vpop.f32.mrf.mxu0
  %571 = vmatprep.mubr.f32.mxu0 %v190
  %572 = vmatmul.mubr.f32.gmra.mxu0 %v174
  %v573 = vpop.f32.mrf.mxu0
  %v574 = vadd.f32 0.0, %v573
  %v575 = vpop.f32.mrf.mxu0
  %576 = vmatprep.mubr.f32.mxu0 %v191
  %577 = vmatmul.mubr.f32.gmra.mxu0 %v175
  %v578 = vpop.f32.mrf.mxu0
  %v579 = vadd.f32 0.0, %v578
  %v580 = vpop.f32.mrf.mxu0
  %581 = vmatprep.mubr.f32.mxu0 %v192
  %582 = vmatmul.mubr.f32.gmra.mxu0 %v176
  %v583 = vpop.f32.mrf.mxu0
  %v584 = vadd.f32 0.0, %v583
  %v585 = vpop.f32.mrf.mxu0
  %586 = vmatprep.mubr.f32.mxu0 %v193
  %587 = vmatmul.mubr.f32.gmra.mxu0 %v177
  %v588 = vpop.f32.mrf.mxu0
  %v589 = vadd.f32 0.0, %v588
  %v590 = vpop.f32.mrf.mxu0
  %591 = vmatprep.mubr.f32.mxu0 %v194
  %592 = vmatmul.mubr.f32.gmra.mxu0 %v178
  %v593 = vpop.f32.mrf.mxu0
  %v594 = vadd.f32 0.0, %v593
  %v595 = vpop.f32.mrf.mxu0
  %596 = vdwg.mxu0
  %597 = vmatprep.subr.mxu0 0.0
  %598 = vmatpush1.msra.mxu0 %v355
  %599 = vmatprep.subr.mxu0 0.0
  %600 = vmatpush1.msra.mxu0 %v354
  %601 = vmatprep.subr.mxu0 0.0
  %602 = vmatpush1.msra.mxu0 %v353
  %603 = vmatprep.subr.mxu0 0.0
  %604 = vmatpush1.msra.mxu0 %v352
  %605 = vmatprep.subr.mxu0 0.0
  %606 = vmatpush1.msra.mxu0 %v351
  %607 = vmatprep.subr.mxu0 0.0
  %608 = vmatpush1.msra.mxu0 %v350
  %609 = vmatprep.subr.mxu0 0.0
  %610 = vmatpush1.msra.mxu0 %v349
  %611 = vmatprep.subr.mxu0 0.0
  %612 = vmatpush1.msra.mxu0 %v348
  %613 = vmatprep.subr.mxu0 0.0
  %614 = vmatpush1.msra.mxu0 %v347
  %615 = vmatprep.subr.mxu0 0.0
  %616 = vmatpush1.msra.mxu0 %v346
  %617 = vmatprep.subr.mxu0 0.0
  %618 = vmatpush1.msra.mxu0 %v345
  %619 = vmatprep.subr.mxu0 0.0
  %620 = vmatpush1.msra.mxu0 %v344
  %621 = vmatprep.subr.mxu0 0.0
  %622 = vmatpush1.msra.mxu0 %v343
  %623 = vmatprep.subr.mxu0 0.0
  %624 = vmatpush1.msra.mxu0 %v342
  %625 = vmatprep.subr.mxu0 0.0
  %626 = vmatpush1.msra.mxu0 %v341
  %627 = vmatprep.subr.mxu0 0.0
  %628 = vmatpush1.msra.mxu0 %v340
  %629 = vmatprep.subr.mxu0 0.0
  %630 = vmatpush2.msra.mxu0 %v371
  %631 = vmatprep.subr.mxu0 0.0
  %632 = vmatpush2.msra.mxu0 %v370
  %633 = vmatprep.subr.mxu0 0.0
  %634 = vmatpush2.msra.mxu0 %v369
  %635 = vmatprep.subr.mxu0 0.0
  %636 = vmatpush2.msra.mxu0 %v368
  %637 = vmatprep.subr.mxu0 0.0
  %638 = vmatpush2.msra.mxu0 %v367
  %639 = vmatprep.subr.mxu0 0.0
  %640 = vmatpush2.msra.mxu0 %v366
  %641 = vmatprep.subr.mxu0 0.0
  %642 = vmatpush2.msra.mxu0 %v365
  %643 = vmatprep.subr.mxu0 0.0
  %644 = vmatpush2.msra.mxu0 %v364
  %645 = vmatprep.subr.mxu0 0.0
  %646 = vmatpush2.msra.mxu0 %v363
  %647 = vmatprep.subr.mxu0 0.0
  %648 = vmatpush2.msra.mxu0 %v362
  %649 = vmatprep.subr.mxu0 0.0
  %650 = vmatpush2.msra.mxu0 %v361
  %651 = vmatprep.subr.mxu0 0.0
  %652 = vmatpush2.msra.mxu0 %v360
  %653 = vmatprep.subr.mxu0 0.0
  %654 = vmatpush2.msra.mxu0 %v359
  %655 = vmatprep.subr.mxu0 0.0
  %656 = vmatpush2.msra.mxu0 %v358
  %657 = vmatprep.subr.mxu0 0.0
  %658 = vmatpush2.msra.mxu0 %v357
  %659 = vmatprep.subr.mxu0 0.0
  %660 = vmatpush2.msra.mxu0 %v356
  %661 = vmatprep.mubr.f32.mxu0 %v211
  %662 = vmatmul.mubr.f32.gmra.mxu0 %v195
  %v663 = vpop.f32.mrf.mxu0
  %v664 = vadd.f32 %v519, %v663
  %v665 = vpop.f32.mrf.mxu0
  %666 = vmatprep.mubr.f32.mxu0 %v212
  %667 = vmatmul.mubr.f32.gmra.mxu0 %v196
  %v668 = vpop.f32.mrf.mxu0
  %v669 = vadd.f32 %v524, %v668
  %v670 = vpop.f32.mrf.mxu0
  %671 = vmatprep.mubr.f32.mxu0 %v213
  %672 = vmatmul.mubr.f32.gmra.mxu0 %v197
  %v673 = vpop.f32.mrf.mxu0
  %v674 = vadd.f32 %v529, %v673
  %v675 = vpop.f32.mrf.mxu0
  %676 = vmatprep.mubr.f32.mxu0 %v214
  %677 = vmatmul.mubr.f32.gmra.mxu0 %v198
  %v678 = vpop.f32.mrf.mxu0
  %v679 = vadd.f32 %v534, %v678
  %v680 = vpop.f32.mrf.mxu0
  %681 = vmatprep.mubr.f32.mxu0 %v215
  %682 = vmatmul.mubr.f32.gmra.mxu0 %v199
  %v683 = vpop.f32.mrf.mxu0
  %v684 = vadd.f32 %v539, %v683
  %v685 = vpop.f32.mrf.mxu0
  %686 = vmatprep.mubr.f32.mxu0 %v216
  %687 = vmatmul.mubr.f32.gmra.mxu0 %v200
  %v688 = vpop.f32.mrf.mxu0
  %v689 = vadd.f32 %v544, %v688
  %v690 = vpop.f32.mrf.mxu0
  %691 = vmatprep.mubr.f32.mxu0 %v217
  %692 = vmatmul.mubr.f32.gmra.mxu0 %v201
  %v693 = vpop.f32.mrf.mxu0
  %v694 = vadd.f32 %v549, %v693
  %v695 = vpop.f32.mrf.mxu0
  %696 = vmatprep.mubr.f32.mxu0 %v218
  %697 = vmatmul.mubr.f32.gmra.mxu0 %v202
  %v698 = vpop.f32.mrf.mxu0
  %v699 = vadd.f32 %v554, %v698
  %v700 = vpop.f32.mrf.mxu0
  %701 = vmatprep.mubr.f32.mxu0 %v219
  %702 = vmatmul.mubr.f32.gmra.mxu0 %v203
  %v703 = vpop.f32.mrf.mxu0
  %v704 = vadd.f32 %v559, %v703
  %v705 = vpop.f32.mrf.mxu0
  %706 = vmatprep.mubr.f32.mxu0 %v220
  %707 = vmatmul.mubr.f32.gmra.mxu0 %v204
  %v708 = vpop.f32.mrf.mxu0
  %v709 = vadd.f32 %v564, %v708
  %v710 = vpop.f32.mrf.mxu0
  %711 = vmatprep.mubr.f32.mxu0 %v221
  %712 = vmatmul.mubr.f32.gmra.mxu0 %v205
  %v713 = vpop.f32.mrf.mxu0
  %v714 = vadd.f32 %v569, %v713
  %v715 = vpop.f32.mrf.mxu0
  %716 = vmatprep.mubr.f32.mxu0 %v222
  %717 = vmatmul.mubr.f32.gmra.mxu0 %v206
  %v718 = vpop.f32.mrf.mxu0
  %v719 = vadd.f32 %v574, %v718
  %v720 = vpop.f32.mrf.mxu0
  %721 = vmatprep.mubr.f32.mxu0 %v223
  %722 = vmatmul.mubr.f32.gmra.mxu0 %v207
  %v723 = vpop.f32.mrf.mxu0
  %v724 = vadd.f32 %v579, %v723
  %v725 = vpop.f32.mrf.mxu0
  %726 = vmatprep.mubr.f32.mxu0 %v224
  %727 = vmatmul.mubr.f32.gmra.mxu0 %v208
  %v728 = vpop.f32.mrf.mxu0
  %v729 = vadd.f32 %v584, %v728
  %v730 = vpop.f32.mrf.mxu0
  %731 = vmatprep.mubr.f32.mxu0 %v225
  %732 = vmatmul.mubr.f32.gmra.mxu0 %v209
  %v733 = vpop.f32.mrf.mxu0
  %v734 = vadd.f32 %v589, %v733
  %v735 = vpop.f32.mrf.mxu0
  %736 = vmatprep.mubr.f32.mxu0 %v226
  %737 = vmatmul.mubr.f32.gmra.mxu0 %v210
  %v738 = vpop.f32.mrf.mxu0
  %v739 = vadd.f32 %v594, %v738
  %v740 = vpop.f32.mrf.mxu0
  %741 = vdwg.mxu0
  %742 = vmatprep.subr.mxu0 0.0
  %743 = vmatpush1.msra.mxu0 %v387
  %744 = vmatprep.subr.mxu0 0.0
  %745 = vmatpush1.msra.mxu0 %v386
  %746 = vmatprep.subr.mxu0 0.0
  %747 = vmatpush1.msra.mxu0 %v385
  %748 = vmatprep.subr.mxu0 0.0
  %749 = vmatpush1.msra.mxu0 %v384
  %750 = vmatprep.subr.mxu0 0.0
  %751 = vmatpush1.msra.mxu0 %v383
  %752 = vmatprep.subr.mxu0 0.0
  %753 = vmatpush1.msra.mxu0 %v382
  %754 = vmatprep.subr.mxu0 0.0
  %755 = vmatpush1.msra.mxu0 %v381
  %756 = vmatprep.subr.mxu0 0.0
  %757 = vmatpush1.msra.mxu0 %v380
  %758 = vmatprep.subr.mxu0 0.0
  %759 = vmatpush1.msra.mxu0 %v379
  %760 = vmatprep.subr.mxu0 0.0
  %761 = vmatpush1.msra.mxu0 %v378
  %762 = vmatprep.subr.mxu0 0.0
  %763 = vmatpush1.msra.mxu0 %v377
  %764 = vmatprep.subr.mxu0 0.0
  %765 = vmatpush1.msra.mxu0 %v376
  %766 = vmatprep.subr.mxu0 0.0
  %767 = vmatpush1.msra.mxu0 %v375
  %768 = vmatprep.subr.mxu0 0.0
  %769 = vmatpush1.msra.mxu0 %v374
  %770 = vmatprep.subr.mxu0 0.0
  %771 = vmatpush1.msra.mxu0 %v373
  %772 = vmatprep.subr.mxu0 0.0
  %773 = vmatpush1.msra.mxu0 %v372
  %774 = vmatprep.subr.mxu0 0.0
  %775 = vmatpush2.msra.mxu0 %v403
  %776 = vmatprep.subr.mxu0 0.0
  %777 = vmatpush2.msra.mxu0 %v402
  %778 = vmatprep.subr.mxu0 0.0
  %779 = vmatpush2.msra.mxu0 %v401
  %780 = vmatprep.subr.mxu0 0.0
  %781 = vmatpush2.msra.mxu0 %v400
  %782 = vmatprep.subr.mxu0 0.0
  %783 = vmatpush2.msra.mxu0 %v399
  %784 = vmatprep.subr.mxu0 0.0
  %785 = vmatpush2.msra.mxu0 %v398
  %786 = vmatprep.subr.mxu0 0.0
  %787 = vmatpush2.msra.mxu0 %v397
  %788 = vmatprep.subr.mxu0 0.0
  %789 = vmatpush2.msra.mxu0 %v396
  %790 = vmatprep.subr.mxu0 0.0
  %791 = vmatpush2.msra.mxu0 %v395
  %792 = vmatprep.subr.mxu0 0.0
  %793 = vmatpush2.msra.mxu0 %v394
  %794 = vmatprep.subr.mxu0 0.0
  %795 = vmatpush2.msra.mxu0 %v393
  %796 = vmatprep.subr.mxu0 0.0
  %797 = vmatpush2.msra.mxu0 %v392
  %798 = vmatprep.subr.mxu0 0.0
  %799 = vmatpush2.msra.mxu0 %v391
  %800 = vmatprep.subr.mxu0 0.0
  %801 = vmatpush2.msra.mxu0 %v390
  %802 = vmatprep.subr.mxu0 0.0
  %803 = vmatpush2.msra.mxu0 %v389
  %804 = vmatprep.subr.mxu0 0.0
  %805 = vmatpush2.msra.mxu0 %v388
  %806 = vmatprep.mubr.f32.mxu0 %v243
  %807 = vmatmul.mubr.f32.gmra.mxu0 %v227
  %v808 = vpop.f32.mrf.mxu0
  %v809 = vadd.f32 %v664, %v808
  %v810 = vpop.f32.mrf.mxu0
  %811 = vmatprep.mubr.f32.mxu0 %v244
  %812 = vmatmul.mubr.f32.gmra.mxu0 %v228
  %v813 = vpop.f32.mrf.mxu0
  %v814 = vadd.f32 %v669, %v813
  %v815 = vpop.f32.mrf.mxu0
  %816 = vmatprep.mubr.f32.mxu0 %v245
  %817 = vmatmul.mubr.f32.gmra.mxu0 %v229
  %v818 = vpop.f32.mrf.mxu0
  %v819 = vadd.f32 %v674, %v818
  %v820 = vpop.f32.mrf.mxu0
  %821 = vmatprep.mubr.f32.mxu0 %v246
  %822 = vmatmul.mubr.f32.gmra.mxu0 %v230
  %v823 = vpop.f32.mrf.mxu0
  %v824 = vadd.f32 %v679, %v823
  %v825 = vpop.f32.mrf.mxu0
  %826 = vmatprep.mubr.f32.mxu0 %v247
  %827 = vmatmul.mubr.f32.gmra.mxu0 %v231
  %v828 = vpop.f32.mrf.mxu0
  %v829 = vadd.f32 %v684, %v828
  %v830 = vpop.f32.mrf.mxu0
  %831 = vmatprep.mubr.f32.mxu0 %v248
  %832 = vmatmul.mubr.f32.gmra.mxu0 %v232
  %v833 = vpop.f32.mrf.mxu0
  %v834 = vadd.f32 %v689, %v833
  %v835 = vpop.f32.mrf.mxu0
  %836 = vmatprep.mubr.f32.mxu0 %v249
  %837 = vmatmul.mubr.f32.gmra.mxu0 %v233
  %v838 = vpop.f32.mrf.mxu0
  %v839 = vadd.f32 %v694, %v838
  %v840 = vpop.f32.mrf.mxu0
  %841 = vmatprep.mubr.f32.mxu0 %v250
  %842 = vmatmul.mubr.f32.gmra.mxu0 %v234
  %v843 = vpop.f32.mrf.mxu0
  %v844 = vadd.f32 %v699, %v843
  %v845 = vpop.f32.mrf.mxu0
  %846 = vmatprep.mubr.f32.mxu0 %v251
  %847 = vmatmul.mubr.f32.gmra.mxu0 %v235
  %v848 = vpop.f32.mrf.mxu0
  %v849 = vadd.f32 %v704, %v848
  %v850 = vpop.f32.mrf.mxu0
  %851 = vmatprep.mubr.f32.mxu0 %v252
  %852 = vmatmul.mubr.f32.gmra.mxu0 %v236
  %v853 = vpop.f32.mrf.mxu0
  %v854 = vadd.f32 %v709, %v853
  %v855 = vpop.f32.mrf.mxu0
  %856 = vmatprep.mubr.f32.mxu0 %v253
  %857 = vmatmul.mubr.f32.gmra.mxu0 %v237
  %v858 = vpop.f32.mrf.mxu0
  %v859 = vadd.f32 %v714, %v858
  %v860 = vpop.f32.mrf.mxu0
  %861 = vmatprep.mubr.f32.mxu0 %v254
  %862 = vmatmul.mubr.f32.gmra.mxu0 %v238
  %v863 = vpop.f32.mrf.mxu0
  %v864 = vadd.f32 %v719, %v863
  %v865 = vpop.f32.mrf.mxu0
  %866 = vmatprep.mubr.f32.mxu0 %v255
  %867 = vmatmul.mubr.f32.gmra.mxu0 %v239
  %v868 = vpop.f32.mrf.mxu0
  %v869 = vadd.f32 %v724, %v868
  %v870 = vpop.f32.mrf.mxu0
  %871 = vmatprep.mubr.f32.mxu0 %v256
  %872 = vmatmul.mubr.f32.gmra.mxu0 %v240
  %v873 = vpop.f32.mrf.mxu0
  %v874 = vadd.f32 %v729, %v873
  %v875 = vpop.f32.mrf.mxu0
  %876 = vmatprep.mubr.f32.mxu0 %v257
  %877 = vmatmul.mubr.f32.gmra.mxu0 %v241
  %v878 = vpop.f32.mrf.mxu0
  %v879 = vadd.f32 %v734, %v878
  %v880 = vpop.f32.mrf.mxu0
  %881 = vmatprep.mubr.f32.mxu0 %v258
  %882 = vmatmul.mubr.f32.gmra.mxu0 %v242
  %v883 = vpop.f32.mrf.mxu0
  %v884 = vadd.f32 %v739, %v883
  %v885 = vpop.f32.mrf.mxu0
  %886 = vdwg.mxu0
  %887 = vmatprep.subr.mxu0 0.0
  %888 = vmatpush1.msra.mxu0 %v419
  %889 = vmatprep.subr.mxu0 0.0
  %890 = vmatpush1.msra.mxu0 %v418
  %891 = vmatprep.subr.mxu0 0.0
  %892 = vmatpush1.msra.mxu0 %v417
  %893 = vmatprep.subr.mxu0 0.0
  %894 = vmatpush1.msra.mxu0 %v416
  %895 = vmatprep.subr.mxu0 0.0
  %896 = vmatpush1.msra.mxu0 %v415
  %897 = vmatprep.subr.mxu0 0.0
  %898 = vmatpush1.msra.mxu0 %v414
  %899 = vmatprep.subr.mxu0 0.0
  %900 = vmatpush1.msra.mxu0 %v413
  %901 = vmatprep.subr.mxu0 0.0
  %902 = vmatpush1.msra.mxu0 %v412
  %903 = vmatprep.subr.mxu0 0.0
  %904 = vmatpush1.msra.mxu0 %v411
  %905 = vmatprep.subr.mxu0 0.0
  %906 = vmatpush1.msra.mxu0 %v410
  %907 = vmatprep.subr.mxu0 0.0
  %908 = vmatpush1.msra.mxu0 %v409
  %909 = vmatprep.subr.mxu0 0.0
  %910 = vmatpush1.msra.mxu0 %v408
  %911 = vmatprep.subr.mxu0 0.0
  %912 = vmatpush1.msra.mxu0 %v407
  %913 = vmatprep.subr.mxu0 0.0
  %914 = vmatpush1.msra.mxu0 %v406
  %915 = vmatprep.subr.mxu0 0.0
  %916 = vmatpush1.msra.mxu0 %v405
  %917 = vmatprep.subr.mxu0 0.0
  %918 = vmatpush1.msra.mxu0 %v404
  %919 = vmatprep.subr.mxu0 0.0
  %920 = vmatpush2.msra.mxu0 %v435
  %921 = vmatprep.subr.mxu0 0.0
  %922 = vmatpush2.msra.mxu0 %v434
  %923 = vmatprep.subr.mxu0 0.0
  %924 = vmatpush2.msra.mxu0 %v433
  %925 = vmatprep.subr.mxu0 0.0
  %926 = vmatpush2.msra.mxu0 %v432
  %927 = vmatprep.subr.mxu0 0.0
  %928 = vmatpush2.msra.mxu0 %v431
  %929 = vmatprep.subr.mxu0 0.0
  %930 = vmatpush2.msra.mxu0 %v430
  %931 = vmatprep.subr.mxu0 0.0
  %932 = vmatpush2.msra.mxu0 %v429
  %933 = vmatprep.subr.mxu0 0.0
  %934 = vmatpush2.msra.mxu0 %v428
  %935 = vmatprep.subr.mxu0 0.0
  %936 = vmatpush2.msra.mxu0 %v427
  %937 = vmatprep.subr.mxu0 0.0
  %938 = vmatpush2.msra.mxu0 %v426
  %939 = vmatprep.subr.mxu0 0.0
  %940 = vmatpush2.msra.mxu0 %v425
  %941 = vmatprep.subr.mxu0 0.0
  %942 = vmatpush2.msra.mxu0 %v424
  %943 = vmatprep.subr.mxu0 0.0
  %944 = vmatpush2.msra.mxu0 %v423
  %945 = vmatprep.subr.mxu0 0.0
  %946 = vmatpush2.msra.mxu0 %v422
  %947 = vmatprep.subr.mxu0 0.0
  %948 = vmatpush2.msra.mxu0 %v421
  %949 = vmatprep.subr.mxu0 0.0
  %950 = vmatpush2.msra.mxu0 %v420
  %951 = vmatprep.mubr.f32.mxu0 %v276
  %952 = vmatmul.mubr.f32.gmra.mxu0 %v260
  %v953 = vpop.f32.mrf.mxu0
  %v954 = vadd.f32 %v809, %v953
  %v955 = vpop.f32.mrf.mxu0
  %956 = vmatprep.mubr.f32.mxu0 %v277
  %957 = vmatmul.mubr.f32.gmra.mxu0 %v261
  %v958 = vpop.f32.mrf.mxu0
  %v959 = vadd.f32 %v814, %v958
  %v960 = vpop.f32.mrf.mxu0
  %961 = vmatprep.mubr.f32.mxu0 %v278
  %962 = vmatmul.mubr.f32.gmra.mxu0 %v262
  %v963 = vpop.f32.mrf.mxu0
  %v964 = vadd.f32 %v819, %v963
  %v965 = vpop.f32.mrf.mxu0
  %966 = vmatprep.mubr.f32.mxu0 %v279
  %967 = vmatmul.mubr.f32.gmra.mxu0 %v263
  %v968 = vpop.f32.mrf.mxu0
  %v969 = vadd.f32 %v824, %v968
  %v970 = vpop.f32.mrf.mxu0
  %971 = vmatprep.mubr.f32.mxu0 %v280
  %972 = vmatmul.mubr.f32.gmra.mxu0 %v264
  %v973 = vpop.f32.mrf.mxu0
  %v974 = vadd.f32 %v829, %v973
  %v975 = vpop.f32.mrf.mxu0
  %976 = vmatprep.mubr.f32.mxu0 %v281
  %977 = vmatmul.mubr.f32.gmra.mxu0 %v265
  %v978 = vpop.f32.mrf.mxu0
  %v979 = vadd.f32 %v834, %v978
  %v980 = vpop.f32.mrf.mxu0
  %981 = vmatprep.mubr.f32.mxu0 %v282
  %982 = vmatmul.mubr.f32.gmra.mxu0 %v266
  %v983 = vpop.f32.mrf.mxu0
  %v984 = vadd.f32 %v839, %v983
  %v985 = vpop.f32.mrf.mxu0
  %986 = vmatprep.mubr.f32.mxu0 %v283
  %987 = vmatmul.mubr.f32.gmra.mxu0 %v267
  %v988 = vpop.f32.mrf.mxu0
  %v989 = vadd.f32 %v844, %v988
  %v990 = vpop.f32.mrf.mxu0
  %991 = vmatprep.mubr.f32.mxu0 %v284
  %992 = vmatmul.mubr.f32.gmra.mxu0 %v268
  %v993 = vpop.f32.mrf.mxu0
  %v994 = vadd.f32 %v849, %v993
  %v995 = vpop.f32.mrf.mxu0
  %996 = vmatprep.mubr.f32.mxu0 %v285
  %997 = vmatmul.mubr.f32.gmra.mxu0 %v269
  %v998 = vpop.f32.mrf.mxu0
  %v999 = vadd.f32 %v854, %v998
  %v1000 = vpop.f32.mrf.mxu0
  %1001 = vmatprep.mubr.f32.mxu0 %v286
  %1002 = vmatmul.mubr.f32.gmra.mxu0 %v270
  %v1003 = vpop.f32.mrf.mxu0
  %v1004 = vadd.f32 %v859, %v1003
  %v1005 = vpop.f32.mrf.mxu0
  %1006 = vmatprep.mubr.f32.mxu0 %v287
  %1007 = vmatmul.mubr.f32.gmra.mxu0 %v271
  %v1008 = vpop.f32.mrf.mxu0
  %v1009 = vadd.f32 %v864, %v1008
  %v1010 = vpop.f32.mrf.mxu0
  %1011 = vmatprep.mubr.f32.mxu0 %v288
  %1012 = vmatmul.mubr.f32.gmra.mxu0 %v272
  %v1013 = vpop.f32.mrf.mxu0
  %v1014 = vadd.f32 %v869, %v1013
  %v1015 = vpop.f32.mrf.mxu0
  %1016 = vmatprep.mubr.f32.mxu0 %v289
  %1017 = vmatmul.mubr.f32.gmra.mxu0 %v273
  %v1018 = vpop.f32.mrf.mxu0
  %v1019 = vadd.f32 %v874, %v1018
  %v1020 = vpop.f32.mrf.mxu0
  %1021 = vmatprep.mubr.f32.mxu0 %v290
  %1022 = vmatmul.mubr.f32.gmra.mxu0 %v274
  %v1023 = vpop.f32.mrf.mxu0
  %v1024 = vadd.f32 %v879, %v1023
  %v1025 = vpop.f32.mrf.mxu0
  %1026 = vmatprep.mubr.f32.mxu0 %v291
  %1027 = vmatmul.mubr.f32.gmra.mxu0 %v275
  %v1028 = vpop.f32.mrf.mxu0
  %v1029 = vadd.f32 %v884, %v1028
  %v1030 = vpop.f32.mrf.mxu0
  %1031 = vdwg.mxu0
  %1032 = vmatprep.subr.mxu0 0.0
  %1033 = vmatpush1.msra.mxu0 %v451
  %1034 = vmatprep.subr.mxu0 0.0
  %1035 = vmatpush1.msra.mxu0 %v450
  %1036 = vmatprep.subr.mxu0 0.0
  %1037 = vmatpush1.msra.mxu0 %v449
  %1038 = vmatprep.subr.mxu0 0.0
  %1039 = vmatpush1.msra.mxu0 %v448
  %1040 = vmatprep.subr.mxu0 0.0
  %1041 = vmatpush1.msra.mxu0 %v447
  %1042 = vmatprep.subr.mxu0 0.0
  %1043 = vmatpush1.msra.mxu0 %v446
  %1044 = vmatprep.subr.mxu0 0.0
  %1045 = vmatpush1.msra.mxu0 %v445
  %1046 = vmatprep.subr.mxu0 0.0
  %1047 = vmatpush1.msra.mxu0 %v444
  %1048 = vmatprep.subr.mxu0 0.0
  %1049 = vmatpush1.msra.mxu0 %v443
  %1050 = vmatprep.subr.mxu0 0.0
  %1051 = vmatpush1.msra.mxu0 %v442
  %1052 = vmatprep.subr.mxu0 0.0
  %1053 = vmatpush1.msra.mxu0 %v441
  %1054 = vmatprep.subr.mxu0 0.0
  %1055 = vmatpush1.msra.mxu0 %v440
  %1056 = vmatprep.subr.mxu0 0.0
  %1057 = vmatpush1.msra.mxu0 %v439
  %1058 = vmatprep.subr.mxu0 0.0
  %1059 = vmatpush1.msra.mxu0 %v438
  %1060 = vmatprep.subr.mxu0 0.0
  %1061 = vmatpush1.msra.mxu0 %v437
  %1062 = vmatprep.subr.mxu0 0.0
  %1063 = vmatpush1.msra.mxu0 %v436
  %1064 = vmatprep.subr.mxu0 0.0
  %1065 = vmatpush2.msra.mxu0 0.0
  %1066 = vmatprep.subr.mxu0 0.0
  %1067 = vmatpush2.msra.mxu0 0.0
  %1068 = vmatprep.subr.mxu0 0.0
  %1069 = vmatpush2.msra.mxu0 0.0
  %1070 = vmatprep.subr.mxu0 0.0
  %1071 = vmatpush2.msra.mxu0 0.0
  %1072 = vmatprep.subr.mxu0 0.0
  %1073 = vmatpush2.msra.mxu0 0.0
  %1074 = vmatprep.subr.mxu0 0.0
  %1075 = vmatpush2.msra.mxu0 0.0
  %1076 = vmatprep.subr.mxu0 0.0
  %1077 = vmatpush2.msra.mxu0 0.0
  %1078 = vmatprep.subr.mxu0 0.0
  %1079 = vmatpush2.msra.mxu0 0.0
  %1080 = vmatprep.subr.mxu0 0.0
  %1081 = vmatpush2.msra.mxu0 0.0
  %1082 = vmatprep.subr.mxu0 0.0
  %1083 = vmatpush2.msra.mxu0 0.0
  %1084 = vmatprep.subr.mxu0 0.0
  %1085 = vmatpush2.msra.mxu0 0.0
  %1086 = vmatprep.subr.mxu0 0.0
  %1087 = vmatpush2.msra.mxu0 0.0
  %1088 = vmatprep.subr.mxu0 0.0
  %1089 = vmatpush2.msra.mxu0 0.0
  %1090 = vmatprep.subr.mxu0 0.0
  %1091 = vmatpush2.msra.mxu0 0.0
  %1092 = vmatprep.subr.mxu0 0.0
  %1093 = vmatpush2.msra.mxu0 0.0
  %1094 = vmatprep.subr.mxu0 0.0
  %1095 = vmatpush2.msra.mxu0 0.0
  %1096 = vmatprep.mubr.f32.mxu0 0.0
  %1097 = vmatmul.mubr.f32.gmra.mxu0 %v292
  %v1098 = vpop.f32.mrf.mxu0
  %v1099 = vadd.f32 %v954, %v1098
  %v1100 = vpop.f32.mrf.mxu0
  %1101 = vmatprep.mubr.f32.mxu0 0.0
  %1102 = vmatmul.mubr.f32.gmra.mxu0 %v293
  %v1103 = vpop.f32.mrf.mxu0
  %v1104 = vadd.f32 %v959, %v1103
  %v1105 = vpop.f32.mrf.mxu0
  %1106 = vmatprep.mubr.f32.mxu0 0.0
  %1107 = vmatmul.mubr.f32.gmra.mxu0 %v294
  %v1108 = vpop.f32.mrf.mxu0
  %v1109 = vadd.f32 %v964, %v1108
  %v1110 = vpop.f32.mrf.mxu0
  %1111 = vmatprep.mubr.f32.mxu0 0.0
  %1112 = vmatmul.mubr.f32.gmra.mxu0 %v295
  %v1113 = vpop.f32.mrf.mxu0
  %v1114 = vadd.f32 %v969, %v1113
  %v1115 = vpop.f32.mrf.mxu0
  %1116 = vmatprep.mubr.f32.mxu0 0.0
  %1117 = vmatmul.mubr.f32.gmra.mxu0 %v296
  %v1118 = vpop.f32.mrf.mxu0
  %v1119 = vadd.f32 %v974, %v1118
  %v1120 = vpop.f32.mrf.mxu0
  %1121 = vmatprep.mubr.f32.mxu0 0.0
  %1122 = vmatmul.mubr.f32.gmra.mxu0 %v297
  %v1123 = vpop.f32.mrf.mxu0
  %v1124 = vadd.f32 %v979, %v1123
  %v1125 = vpop.f32.mrf.mxu0
  %1126 = vmatprep.mubr.f32.mxu0 0.0
  %1127 = vmatmul.mubr.f32.gmra.mxu0 %v298
  %v1128 = vpop.f32.mrf.mxu0
  %v1129 = vadd.f32 %v984, %v1128
  %v1130 = vpop.f32.mrf.mxu0
  %1131 = vmatprep.mubr.f32.mxu0 0.0
  %1132 = vmatmul.mubr.f32.gmra.mxu0 %v299
  %v1133 = vpop.f32.mrf.mxu0
  %v1134 = vadd.f32 %v989, %v1133
  %v1135 = vpop.f32.mrf.mxu0
  %1136 = vmatprep.mubr.f32.mxu0 0.0
  %1137 = vmatmul.mubr.f32.gmra.mxu0 %v300
  %v1138 = vpop.f32.mrf.mxu0
  %v1139 = vadd.f32 %v994, %v1138
  %v1140 = vpop.f32.mrf.mxu0
  %1141 = vmatprep.mubr.f32.mxu0 0.0
  %1142 = vmatmul.mubr.f32.gmra.mxu0 %v301
  %v1143 = vpop.f32.mrf.mxu0
  %v1144 = vadd.f32 %v999, %v1143
  %v1145 = vpop.f32.mrf.mxu0
  %1146 = vmatprep.mubr.f32.mxu0 0.0
  %1147 = vmatmul.mubr.f32.gmra.mxu0 %v302
  %v1148 = vpop.f32.mrf.mxu0
  %v1149 = vadd.f32 %v1004, %v1148
  %v1150 = vpop.f32.mrf.mxu0
  %1151 = vmatprep.mubr.f32.mxu0 0.0
  %1152 = vmatmul.mubr.f32.gmra.mxu0 %v303
  %v1153 = vpop.f32.mrf.mxu0
  %v1154 = vadd.f32 %v1009, %v1153
  %v1155 = vpop.f32.mrf.mxu0
  %1156 = vmatprep.mubr.f32.mxu0 0.0
  %1157 = vmatmul.mubr.f32.gmra.mxu0 %v304
  %v1158 = vpop.f32.mrf.mxu0
  %v1159 = vadd.f32 %v1014, %v1158
  %v1160 = vpop.f32.mrf.mxu0
  %1161 = vmatprep.mubr.f32.mxu0 0.0
  %1162 = vmatmul.mubr.f32.gmra.mxu0 %v305
  %v1163 = vpop.f32.mrf.mxu0
  %v1164 = vadd.f32 %v1019, %v1163
  %v1165 = vpop.f32.mrf.mxu0
  %1166 = vmatprep.mubr.f32.mxu0 0.0
  %1167 = vmatmul.mubr.f32.gmra.mxu0 %v306
  %v1168 = vpop.f32.mrf.mxu0
  %v1169 = vadd.f32 %v1024, %v1168
  %v1170 = vpop.f32.mrf.mxu0
  %1171 = vmatprep.mubr.f32.mxu0 0.0
  %1172 = vmatmul.mubr.f32.gmra.mxu0 %v307
  %v1173 = vpop.f32.mrf.mxu0
  %v1174 = vadd.f32 %v1029, %v1173
  %v1175 = vpop.f32.mrf.mxu0
  %1176 = vdwg.mxu0
  %1177 = vst [vmem:[%s4] sm:$0xff] %v1099
  %1178 = vst [vmem:[%s4 + $0x8] sm:$0xff] %v1104
  %1179 = vst [vmem:[%s4 + $0x10] sm:$0xff] %v1109
  %1180 = vst [vmem:[%s4 + $0x18] sm:$0xff] %v1114
  %1181 = vst [vmem:[%s4 + $0x20] sm:$0xff] %v1119
  %1182 = vst [vmem:[%s4 + $0x28] sm:$0xff] %v1124
  %1183 = vst [vmem:[%s4 + $0x30] sm:$0xff] %v1129
  %1184 = vst [vmem:[%s4 + $0x38] sm:$0xff] %v1134
  %1185 = vst [vmem:[%s4 + $0x40] sm:$0xff] %v1139
  %1186 = vst [vmem:[%s4 + $0x48] sm:$0xff] %v1144
  %1187 = vst [vmem:[%s4 + $0x50] sm:$0xff] %v1149
  %1188 = vst [vmem:[%s4 + $0x58] sm:$0xff] %v1154
  %1189 = vst [vmem:[%s4 + $0x60] sm:$0xff] %v1159
  %1190 = vst [vmem:[%s4 + $0x68] sm:$0xff] %v1164
  %1191 = vst [vmem:[%s4 + $0x70] sm:$0xff] %v1169
  %1192 = vst [vmem:[%s4 + $0x78] sm:$0xff] %v1174
  %v1193 = vadd.f32 %v1099, %v1104
  %v1194 = vadd.f32 %v1193, %v1109
  %v1195 = vadd.f32 %v1194, %v1114
  %v1196 = vadd.f32 %v1195, %v1119
  %v1197 = vadd.f32 %v1196, %v1124
  %v1198 = vadd.f32 %v1197, %v1129
  %v1199 = vadd.f32 %v1198, %v1134
  %v1200 = vadd.f32 %v1199, %v1139
  %v1201 = vadd.f32 %v1200, %v1144
  %v1202 = vadd.f32 %v1201, %v1149
  %v1203 = vadd.f32 %v1202, %v1154
  %v1204 = vadd.f32 %v1203, %v1159
  %v1205 = vadd.f32 %v1204, %v1164
  %v1206 = vadd.f32 %v1205, %v1169
  %v1207 = vadd.f32 %v1206, %v1174
  %v1208 = vrot.slane %v1207, 4
  %v1209 = vadd.f32 %v1207, %v1208
  %v1210 = vrot.slane %v1209, 2
  %v1211 = vadd.f32 %v1209, %v1210
  %v1212 = vrot.slane %v1211, 1
  %v1213 = vadd.f32 %v1211, %v1212
  %v1214 = vmul.f32 %v1099, %v1099
  %v1215 = vmul.f32 %v1104, %v1104
  %v1216 = vmul.f32 %v1109, %v1109
  %v1217 = vmul.f32 %v1114, %v1114
  %v1218 = vmul.f32 %v1119, %v1119
  %v1219 = vmul.f32 %v1124, %v1124
  %v1220 = vmul.f32 %v1129, %v1129
  %v1221 = vmul.f32 %v1134, %v1134
  %v1222 = vmul.f32 %v1139, %v1139
  %v1223 = vmul.f32 %v1144, %v1144
  %v1224 = vmul.f32 %v1149, %v1149
  %v1225 = vmul.f32 %v1154, %v1154
  %v1226 = vmul.f32 %v1159, %v1159
  %v1227 = vmul.f32 %v1164, %v1164
  %v1228 = vmul.f32 %v1169, %v1169
  %v1229 = vmul.f32 %v1174, %v1174
  %v1230 = vadd.f32 %v1214, %v1215
  %v1231 = vadd.f32 %v1230, %v1216
  %v1232 = vadd.f32 %v1231, %v1217
  %v1233 = vadd.f32 %v1232, %v1218
  %v1234 = vadd.f32 %v1233, %v1219
  %v1235 = vadd.f32 %v1234, %v1220
  %v1236 = vadd.f32 %v1235, %v1221
  %v1237 = vadd.f32 %v1236, %v1222
  %v1238 = vadd.f32 %v1237, %v1223
  %v1239 = vadd.f32 %v1238, %v1224
  %v1240 = vadd.f32 %v1239, %v1225
  %v1241 = vadd.f32 %v1240, %v1226
  %v1242 = vadd.f32 %v1241, %v1227
  %v1243 = vadd.f32 %v1242, %v1228
  %v1244 = vadd.f32 %v1243, %v1229
  %v1245 = vrot.slane %v1244, 4
  %v1246 = vadd.f32 %v1244, %v1245
  %v1247 = vrot.slane %v1246, 2
  %v1248 = vadd.f32 %v1246, %v1247
  %v1249 = vrot.slane %v1248, 1
  %v1250 = vadd.f32 %v1248, %v1249
  %vm1251 = vcmask 1040384
  %v1252 = vsel %vm1251, %v1213, %v1250
  %1253 = vst [vmem:[%s5] sm:$0x3] %v1252
  // Predicated region
  $region18: #{res_bottleneck.5} parent=0 // pred_check
    _
  $region19: #{res_bottleneck.5} parent=0 // pred_check_branch
    %1255 = sbr.rel (0) target = $region21
  $region20: #{res_bottleneck.5} parent=0 // pred_region
    _
  $region21: #{res_bottleneck.5} parent=0 // pred_fallthru
    _
  // Predicated region
  $region22: #{res_bottleneck.5} parent=0 // pred_check
    _
  $region23: #{res_bottleneck.5} parent=0 // pred_check_branch
    %1257 = sbr.rel (0) target = $region25
  $region24: #{res_bottleneck.5} parent=0 // pred_region
    _
  $region25: #{res_bottleneck.5} parent=0 // pred_fallthru
    _
  // Predicated region
  $region26: #{res_bottleneck.5} parent=0 // pred_check
    _
  $region27: #{res_bottleneck.5} parent=0 // pred_check_branch
    %1259 = sbr.rel (0) target = $region29
  $region28: #{res_bottleneck.5} parent=0 // pred_region
    _
  $region29: #{res_bottleneck.5} parent=0 // pred_fallthru
    _
  // Predicated region
  $region30: #{res_bottleneck.5} parent=0 // pred_check
    _
  $region31: #{res_bottleneck.5} parent=0 // pred_check_branch
    %1261 = sbr.rel (0) target = $region33
  $region32: #{res_bottleneck.5} parent=0 // pred_region
    _
  $region33: #{res_bottleneck.5} parent=0 // pred_fallthru
    _

</llo_original>
